<compile_context>
chip_gen: v5e
topology: v5e:2x2
jax: 0.10.0
libtpu: 0.0.40
codegen_flags: <defaults>
</compile_context>

<pallas_src>
import functools

import jax
import jax.numpy as jnp
from jax.experimental import pallas as pl
from jax.experimental.pallas import tpu as pltpu

LANE = 128
SUBLANE = 8
MAX_TILE_B = 256           # fills 256-wide MXU on v6e/v7x; fine on v5e (128-wide)
MULTI_TILE_THRESHOLD = 128  # above this batch, force >= 2 grid tiles (v7x 2 TCs)


def _round_up(n, m):
    return ((n + m - 1) // m) * m


def mlp_kernel(x_ref, w1_ref, w2_ref, w3_ref, w4_ref, bias_ref, o_ref):
    # x tile: (tile_b, in_dim) f32.  Weights: bf16, stored transposed to
    # (in_features, out_features); fc4 output lane-padded to 128 columns.
    # Biases: packed (4, 512) f32, each row zero-padded to 512.
    x = x_ref[...].astype(jnp.bfloat16)

    b1 = bias_ref[0:1, 0:128]
    b2 = bias_ref[1:2, 0:512]
    b3 = bias_ref[2:3, 0:512]
    b4 = bias_ref[3:4, 0:128]

    # MXU matmuls in bf16 with f32 accumulation; bias-add / ReLU stay f32
    # (portable: v5e has no bf16 VPU; cost is negligible for this MLP).
    h1 = jnp.dot(x, w1_ref[...], preferred_element_type=jnp.float32) + b1
    h1 = jnp.maximum(h1, 0.0)

    h2 = jnp.dot(h1.astype(jnp.bfloat16), w2_ref[...],
                 preferred_element_type=jnp.float32) + b2
    h2 = jnp.maximum(h2, 0.0)

    h3 = jnp.dot(h2.astype(jnp.bfloat16), w3_ref[...],
                 preferred_element_type=jnp.float32) + b3
    h3 = jnp.maximum(h3, 0.0)

    out = jnp.dot(h3.astype(jnp.bfloat16), w4_ref[...],
                  preferred_element_type=jnp.float32) + b4
    # Lane-dense 128-wide store (no masked vst); wrapper slices the real cols.
    o_ref[...] = out.astype(o_ref.dtype)


def linear_model_forward(x, params, action_size, *, single_buffer_weights=True):
    """x: (batch, input_size*stack_frame) f32.  Returns (batch, action_size) f32."""
    batch, in_dim = x.shape

    # Batch tile: multiple of 8 sublanes, capped at 256 rows.  For large
    # batches split into >= 2 tiles so the "parallel" grid axis shards across
    # v7x's two TensorCores (and megacore); for small batches one tile avoids
    # paying the ~0.35 us per-step overhead twice.
    if batch > MULTI_TILE_THRESHOLD:
        tile_b = min(MAX_TILE_B, _round_up(pl.cdiv(batch, 2), SUBLANE))
    else:
        tile_b = min(MAX_TILE_B, _round_up(batch, SUBLANE))
    padded_batch = _round_up(batch, tile_b)
    num_tiles = padded_batch // tile_b
    if padded_batch != batch:
        x = jnp.pad(x, ((0, padded_batch - batch), (0, 0)))

    w1, w2, w3, w4 = params["w1"], params["w2"], params["w3"], params["w4"]
    biases = params["biases"]
    out_pad = w4.shape[1]  # 128 (lane-padded action dim)

    # Constant index maps keep the weights VMEM-resident across all grid
    # steps (weight DMA paid once per call).  Single-buffer them: there is
    # nothing to pipeline for a block that never changes.
    def const_spec(shape):
        if single_buffer_weights:
            return pl.BlockSpec(shape, lambda i: (0, 0),
                                pipeline_mode=pl.Buffered(1))
        return pl.BlockSpec(shape, lambda i: (0, 0))

    flops = 2 * padded_batch * (in_dim * w1.shape[1]
                                + w1.shape[1] * w2.shape[1]
                                + w2.shape[1] * w3.shape[1]
                                + w3.shape[1] * out_pad)
    bytes_accessed = (
        x.size * x.dtype.itemsize
        + sum(w.size * w.dtype.itemsize for w in (w1, w2, w3, w4))
        + biases.size * biases.dtype.itemsize
        + padded_batch * out_pad * 4)

    out = pl.pallas_call(
        mlp_kernel,
        out_shape=jax.ShapeDtypeStruct((padded_batch, out_pad), jnp.float32),
        grid=(num_tiles,),
        in_specs=[
            pl.BlockSpec((tile_b, in_dim), lambda i: (i, 0)),
            const_spec(w1.shape),
            const_spec(w2.shape),
            const_spec(w3.shape),
            const_spec(w4.shape),
            const_spec(biases.shape),
        ],
        out_specs=pl.BlockSpec((tile_b, out_pad), lambda i: (i, 0)),
        compiler_params=pltpu.CompilerParams(
            dimension_semantics=("parallel",)),
        cost_estimate=pl.CostEstimate(
            flops=flops, transcendentals=0, bytes_accessed=bytes_accessed),
    )(x, w1, w2, w3, w4, biases)

    return out[:batch, :action_size]


def init_params(key, input_size, stack_frame, action_size):
    """Deterministic init mimicking nn.Linear's U(-1/sqrt(fan_in), 1/sqrt(fan_in)).

    Weights stored transposed (in, out) in bf16; fc4 output lane-padded to 128.
    Biases packed into one (4, 512) f32 array (rows zero-padded to 512).
    """
    dims = [input_size * stack_frame, 128, 512, 512, action_size]
    padded_out = [128, 512, 512, _round_up(max(action_size, 1), LANE)]
    keys = jax.random.split(key, 8)
    params = {}
    bias_rows = []
    for i in range(4):
        fan_in, fan_out = dims[i], dims[i + 1]
        bound = 1.0 / jnp.sqrt(jnp.float32(fan_in))
        w = jax.random.uniform(keys[2 * i], (fan_in, fan_out),
                               jnp.float32, -bound, bound)
        b = jax.random.uniform(keys[2 * i + 1], (fan_out,),
                               jnp.float32, -bound, bound)
        pad_out = padded_out[i]
        if pad_out != fan_out:
            w = jnp.pad(w, ((0, 0), (0, pad_out - fan_out)))
            b = jnp.pad(b, (0, pad_out - fan_out))
        params[f"w{i+1}"] = w.astype(jnp.bfloat16)
        bias_rows.append(jnp.pad(b, (0, 512 - pad_out)))
    params["biases"] = jnp.stack(bias_rows, axis=0)  # (4, 512) f32
    return params


def reference_forward(x, params, action_size):
    """Pure-JAX reference mirroring the kernel's bf16-matmul / f32-accumulate math."""
    def layer(h, w, b, relu):
        y = jnp.dot(h.astype(jnp.bfloat16), w,
                    preferred_element_type=jnp.float32) + b
        return jnp.maximum(y, 0.0) if relu else y

    b = params["biases"]
    h = layer(x, params["w1"], b[0, :128], True)
    h = layer(h, params["w2"], b[1, :512], True)
    h = layer(h, params["w3"], b[2, :512], True)
    h = layer(h, params["w4"], b[3, :128], False)
    return h[:, :action_size]


if __name__ == "__main__":
    input_size = 5
    stack_frame = 4
    action_size = 3

    key = jax.random.PRNGKey(0)
    k_params, k_x1, k_x2 = jax.random.split(key, 3)
    params = init_params(k_params, input_size, stack_frame, action_size)

    def make_fwd(single_buffer):
        return jax.jit(functools.partial(linear_model_forward,
                                         action_size=action_size,
                                         single_buffer_weights=single_buffer))

    # Small-batch (DQN act) path: batch=2 -> single 8-row tile.
    x_small = jax.random.normal(k_x1, (2, input_size * stack_frame), jnp.float32)
    fwd = make_fwd(True)
    try:
        out_small = jax.block_until_ready(fwd(x_small, params))
    except Exception:
        # Fallback if this Pallas version rejects Buffered(1) on the outer
        # grid pipeline: identical math, default double-buffered weights.
        fwd = make_fwd(False)
        out_small = jax.block_until_ready(fwd(x_small, params))

    ref_small = reference_forward(x_small, params, action_size)
    assert out_small.shape == (2, action_size)
    assert jnp.allclose(out_small, ref_small, atol=2e-2, rtol=2e-2), \
        float(jnp.max(jnp.abs(out_small - ref_small)))

    # Training-batch path: batch=384 -> two 192-row tiles on the "parallel"
    # grid axis (exercises multi-tile sharding and batch padding/slicing).
    x_big = jax.random.normal(k_x2, (384, input_size * stack_frame), jnp.float32)
    out_big = jax.block_until_ready(fwd(x_big, params))
    ref_big = reference_forward(x_big, params, action_size)
    assert out_big.shape == (384, action_size)
    assert jnp.allclose(out_big, ref_big, atol=2e-2, rtol=2e-2), \
        float(jnp.max(jnp.abs(out_big - ref_big)))

    print("KERNEL_OK")
</pallas_src>

<mosaic_0001>
module attributes {stable_mosaic.version = 11 : i64} {
  func.func @mlp_kernel(%arg0: i32, %arg1: memref<8x20xf32, #tpu.memory_space<vmem>>, %arg2: memref<20x128xbf16, #tpu.memory_space<vmem>>, %arg3: memref<128x512xbf16, #tpu.memory_space<vmem>>, %arg4: memref<512x512xbf16, #tpu.memory_space<vmem>>, %arg5: memref<512x128xbf16, #tpu.memory_space<vmem>>, %arg6: memref<4x512xf32, #tpu.memory_space<vmem>>, %arg7: memref<8x128xf32, #tpu.memory_space<vmem>>) attributes {dimension_semantics = [#tpu.dimension_semantics<parallel>], iteration_bounds = array<i64: 1>, scalar_prefetch = 0 : i64, scratch_operands = 0 : i64, tpu.core_type = #tpu.core_type<tc>, window_params = [{transform_indices = @transform_0, window_bounds = array<i64: 8, 20>}, {pipeline_mode = #tpu.pipeline_mode<synchronous>, transform_indices = @transform_1, window_bounds = array<i64: 20, 128>}, {pipeline_mode = #tpu.pipeline_mode<synchronous>, transform_indices = @transform_2, window_bounds = array<i64: 128, 512>}, {pipeline_mode = #tpu.pipeline_mode<synchronous>, transform_indices = @transform_3, window_bounds = array<i64: 512, 512>}, {pipeline_mode = #tpu.pipeline_mode<synchronous>, transform_indices = @transform_4, window_bounds = array<i64: 512, 128>}, {pipeline_mode = #tpu.pipeline_mode<synchronous>, transform_indices = @transform_5, window_bounds = array<i64: 4, 512>}, {transform_indices = @transform_6, window_bounds = array<i64: 8, 128>}]} {
    %c0 = arith.constant 0 : index
    %c0_0 = arith.constant 0 : index
    %0 = vector.load %arg1[%c0, %c0_0] : memref<8x20xf32, #tpu.memory_space<vmem>>, vector<8x20xf32>
    %1 = arith.truncf %0 : vector<8x20xf32> to vector<8x20xbf16>
    %c0_1 = arith.constant 0 : index
    %c0_2 = arith.constant 0 : index
    %2 = vector.load %arg6[%c0_1, %c0_2] : memref<4x512xf32, #tpu.memory_space<vmem>>, vector<1x128xf32>
    %c1 = arith.constant 1 : index
    %c0_3 = arith.constant 0 : index
    %3 = vector.load %arg6[%c1, %c0_3] : memref<4x512xf32, #tpu.memory_space<vmem>>, vector<1x512xf32>
    %c2 = arith.constant 2 : index
    %c0_4 = arith.constant 0 : index
    %4 = vector.load %arg6[%c2, %c0_4] : memref<4x512xf32, #tpu.memory_space<vmem>>, vector<1x512xf32>
    %c3 = arith.constant 3 : index
    %c0_5 = arith.constant 0 : index
    %5 = vector.load %arg6[%c3, %c0_5] : memref<4x512xf32, #tpu.memory_space<vmem>>, vector<1x128xf32>
    %c0_6 = arith.constant 0 : index
    %c0_7 = arith.constant 0 : index
    %6 = vector.load %arg2[%c0_6, %c0_7] : memref<20x128xbf16, #tpu.memory_space<vmem>>, vector<20x128xbf16>
    %cst = arith.constant dense<0.000000e+00> : vector<8x128xf32>
    %7 = tpu.matmul %1, %6, %cst {dimension_numbers = #tpu.dot_dimension_numbers<[1], [0], [0], [1], [0, 0, 1, 1], [], []>} : vector<8x20xbf16>, vector<20x128xbf16>, vector<8x128xf32> -> vector<8x128xf32>
    %8 = vector.broadcast %2 : vector<1x128xf32> to vector<8x128xf32>
    %9 = arith.addf %7, %8 : vector<8x128xf32>
    %cst_8 = arith.constant 0.000000e+00 : f32
    %10 = vector.broadcast %cst_8 : f32 to vector<8x128xf32>
    %11 = arith.maximumf %9, %10 : vector<8x128xf32>
    %12 = arith.truncf %11 : vector<8x128xf32> to vector<8x128xbf16>
    %c0_9 = arith.constant 0 : index
    %c0_10 = arith.constant 0 : index
    %13 = vector.load %arg3[%c0_9, %c0_10] : memref<128x512xbf16, #tpu.memory_space<vmem>>, vector<128x512xbf16>
    %cst_11 = arith.constant dense<0.000000e+00> : vector<8x512xf32>
    %14 = tpu.matmul %12, %13, %cst_11 {dimension_numbers = #tpu.dot_dimension_numbers<[1], [0], [0], [1], [0, 0, 1, 1], [], []>} : vector<8x128xbf16>, vector<128x512xbf16>, vector<8x512xf32> -> vector<8x512xf32>
    %15 = vector.broadcast %3 : vector<1x512xf32> to vector<8x512xf32>
    %16 = arith.addf %14, %15 : vector<8x512xf32>
    %cst_12 = arith.constant 0.000000e+00 : f32
    %17 = vector.broadcast %cst_12 : f32 to vector<8x512xf32>
    %18 = arith.maximumf %16, %17 : vector<8x512xf32>
    %19 = arith.truncf %18 : vector<8x512xf32> to vector<8x512xbf16>
    %c0_13 = arith.constant 0 : index
    %c0_14 = arith.constant 0 : index
    %20 = vector.load %arg4[%c0_13, %c0_14] : memref<512x512xbf16, #tpu.memory_space<vmem>>, vector<512x512xbf16>
    %cst_15 = arith.constant dense<0.000000e+00> : vector<8x512xf32>
    %21 = tpu.matmul %19, %20, %cst_15 {dimension_numbers = #tpu.dot_dimension_numbers<[1], [0], [0], [1], [0, 0, 1, 1], [], []>} : vector<8x512xbf16>, vector<512x512xbf16>, vector<8x512xf32> -> vector<8x512xf32>
    %22 = vector.broadcast %4 : vector<1x512xf32> to vector<8x512xf32>
    %23 = arith.addf %21, %22 : vector<8x512xf32>
    %cst_16 = arith.constant 0.000000e+00 : f32
    %24 = vector.broadcast %cst_16 : f32 to vector<8x512xf32>
    %25 = arith.maximumf %23, %24 : vector<8x512xf32>
    %26 = arith.truncf %25 : vector<8x512xf32> to vector<8x512xbf16>
    %c0_17 = arith.constant 0 : index
    %c0_18 = arith.constant 0 : index
    %27 = vector.load %arg5[%c0_17, %c0_18] : memref<512x128xbf16, #tpu.memory_space<vmem>>, vector<512x128xbf16>
    %cst_19 = arith.constant dense<0.000000e+00> : vector<8x128xf32>
    %28 = tpu.matmul %26, %27, %cst_19 {dimension_numbers = #tpu.dot_dimension_numbers<[1], [0], [0], [1], [0, 0, 1, 1], [], []>} : vector<8x512xbf16>, vector<512x128xbf16>, vector<8x128xf32> -> vector<8x128xf32>
    %29 = vector.broadcast %5 : vector<1x128xf32> to vector<8x128xf32>
    %30 = arith.addf %28, %29 : vector<8x128xf32>
    %c0_20 = arith.constant 0 : index
    %c0_21 = arith.constant 0 : index
    %31 = vector.load %arg7[%c0_20, %c0_21] : memref<8x128xf32, #tpu.memory_space<vmem>>, vector<8x128xf32>
    tpu.vector_store %arg7[%c0_20, %c0_21], %30 {strides = array<i32>} : memref<8x128xf32, #tpu.memory_space<vmem>>, vector<8x128xf32>,
    return
  }
  func.func @transform_0(%arg0: i32) -> (i32, i32) {
    %c0_i32 = arith.constant 0 : i32
    %c0_i32_0 = arith.constant 0 : i32
    return %arg0, %c0_i32 : i32, i32
  }
  func.func @transform_1(%arg0: i32) -> (i32, i32) {
    %c0_i32 = arith.constant 0 : i32
    %c0_i32_0 = arith.constant 0 : i32
    %c0_i32_1 = arith.constant 0 : i32
    return %c0_i32, %c0_i32_0 : i32, i32
  }
  func.func @transform_2(%arg0: i32) -> (i32, i32) {
    %c0_i32 = arith.constant 0 : i32
    %c0_i32_0 = arith.constant 0 : i32
    %c0_i32_1 = arith.constant 0 : i32
    return %c0_i32, %c0_i32_0 : i32, i32
  }
  func.func @transform_3(%arg0: i32) -> (i32, i32) {
    %c0_i32 = arith.constant 0 : i32
    %c0_i32_0 = arith.constant 0 : i32
    %c0_i32_1 = arith.constant 0 : i32
    return %c0_i32, %c0_i32_0 : i32, i32
  }
  func.func @transform_4(%arg0: i32) -> (i32, i32) {
    %c0_i32 = arith.constant 0 : i32
    %c0_i32_0 = arith.constant 0 : i32
    %c0_i32_1 = arith.constant 0 : i32
    return %c0_i32, %c0_i32_0 : i32, i32
  }
  func.func @transform_5(%arg0: i32) -> (i32, i32) {
    %c0_i32 = arith.constant 0 : i32
    %c0_i32_0 = arith.constant 0 : i32
    %c0_i32_1 = arith.constant 0 : i32
    return %c0_i32, %c0_i32_0 : i32, i32
  }
  func.func @transform_6(%arg0: i32) -> (i32, i32) {
    %c0_i32 = arith.constant 0 : i32
    %c0_i32_0 = arith.constant 0 : i32
    return %arg0, %c0_i32 : i32, i32
  }
}

module attributes {stable_mosaic.version = 11 : i64} {
  func.func @mlp_kernel(%arg0: i32, %arg1: memref<8x20xf32, #tpu.memory_space<vmem>>, %arg2: memref<20x128xbf16, #tpu.memory_space<vmem>>, %arg3: memref<128x512xbf16, #tpu.memory_space<vmem>>, %arg4: memref<512x512xbf16, #tpu.memory_space<vmem>>, %arg5: memref<512x128xbf16, #tpu.memory_space<vmem>>, %arg6: memref<4x512xf32, #tpu.memory_space<vmem>>, %arg7: memref<8x128xf32, #tpu.memory_space<vmem>>) attributes {dimension_semantics = [#tpu.dimension_semantics<parallel>], iteration_bounds = array<i64: 1>, scalar_prefetch = 0 : i64, scratch_operands = 0 : i64, tpu.core_type = #tpu.core_type<tc>, window_params = [{transform_indices = @transform_0, window_bounds = array<i64: 8, 20>}, {pipeline_mode = #tpu.pipeline_mode<synchronous>, transform_indices = @transform_1, window_bounds = array<i64: 20, 128>}, {pipeline_mode = #tpu.pipeline_mode<synchronous>, transform_indices = @transform_2, window_bounds = array<i64: 128, 512>}, {pipeline_mode = #tpu.pipeline_mode<synchronous>, transform_indices = @transform_3, window_bounds = array<i64: 512, 512>}, {pipeline_mode = #tpu.pipeline_mode<synchronous>, transform_indices = @transform_4, window_bounds = array<i64: 512, 128>}, {pipeline_mode = #tpu.pipeline_mode<synchronous>, transform_indices = @transform_5, window_bounds = array<i64: 4, 512>}, {transform_indices = @transform_6, window_bounds = array<i64: 8, 128>}]} {
    %c0 = arith.constant 0 : index
    %c0_0 = arith.constant 0 : index
    %0 = vector.load %arg1[%c0, %c0_0] : memref<8x20xf32, #tpu.memory_space<vmem>>, vector<8x20xf32>
    %1 = arith.truncf %0 : vector<8x20xf32> to vector<8x20xbf16>
    %c0_1 = arith.constant 0 : index
    %c0_2 = arith.constant 0 : index
    %2 = vector.load %arg6[%c0_1, %c0_2] : memref<4x512xf32, #tpu.memory_space<vmem>>, vector<1x128xf32>
    %c1 = arith.constant 1 : index
    %c0_3 = arith.constant 0 : index
    %3 = vector.load %arg6[%c1, %c0_3] : memref<4x512xf32, #tpu.memory_space<vmem>>, vector<1x512xf32>
    %c2 = arith.constant 2 : index
    %c0_4 = arith.constant 0 : index
    %4 = vector.load %arg6[%c2, %c0_4] : memref<4x512xf32, #tpu.memory_space<vmem>>, vector<1x512xf32>
    %c3 = arith.constant 3 : index
    %c0_5 = arith.constant 0 : index
    %5 = vector.load %arg6[%c3, %c0_5] : memref<4x512xf32, #tpu.memory_space<vmem>>, vector<1x128xf32>
    %c0_6 = arith.constant 0 : index
    %c0_7 = arith.constant 0 : index
    %6 = vector.load %arg2[%c0_6, %c0_7] : memref<20x128xbf16, #tpu.memory_space<vmem>>, vector<20x128xbf16>
    %cst = arith.constant dense<0.000000e+00> : vector<8x128xf32>
    %7 = tpu.matmul %1, %6, %cst {dimension_numbers = #tpu.dot_dimension_numbers<[1], [0], [0], [1], [0, 0, 1, 1], [], []>} : vector<8x20xbf16>, vector<20x128xbf16>, vector<8x128xf32> -> vector<8x128xf32>
    %8 = vector.broadcast %2 : vector<1x128xf32> to vector<8x128xf32>
    %9 = arith.addf %7, %8 : vector<8x128xf32>
    %cst_8 = arith.constant 0.000000e+00 : f32
    %10 = vector.broadcast %cst_8 : f32 to vector<8x128xf32>
    %11 = arith.maximumf %9, %10 : vector<8x128xf32>
    %12 = arith.truncf %11 : vector<8x128xf32> to vector<8x128xbf16>
    %c0_9 = arith.constant 0 : index
    %c0_10 = arith.constant 0 : index
    %13 = vector.load %arg3[%c0_9, %c0_10] : memref<128x512xbf16, #tpu.memory_space<vmem>>, vector<128x512xbf16>
    %cst_11 = arith.constant dense<0.000000e+00> : vector<8x512xf32>
    %14 = tpu.matmul %12, %13, %cst_11 {dimension_numbers = #tpu.dot_dimension_numbers<[1], [0], [0], [1], [0, 0, 1, 1], [], []>} : vector<8x128xbf16>, vector<128x512xbf16>, vector<8x512xf32> -> vector<8x512xf32>
    %15 = vector.broadcast %3 : vector<1x512xf32> to vector<8x512xf32>
    %16 = arith.addf %14, %15 : vector<8x512xf32>
    %cst_12 = arith.constant 0.000000e+00 : f32
    %17 = vector.broadcast %cst_12 : f32 to vector<8x512xf32>
    %18 = arith.maximumf %16, %17 : vector<8x512xf32>
    %19 = arith.truncf %18 : vector<8x512xf32> to vector<8x512xbf16>
    %c0_13 = arith.constant 0 : index
    %c0_14 = arith.constant 0 : index
    %20 = vector.load %arg4[%c0_13, %c0_14] : memref<512x512xbf16, #tpu.memory_space<vmem>>, vector<512x512xbf16>
    %cst_15 = arith.constant dense<0.000000e+00> : vector<8x512xf32>
    %21 = tpu.matmul %19, %20, %cst_15 {dimension_numbers = #tpu.dot_dimension_numbers<[1], [0], [0], [1], [0, 0, 1, 1], [], []>} : vector<8x512xbf16>, vector<512x512xbf16>, vector<8x512xf32> -> vector<8x512xf32>
    %22 = vector.broadcast %4 : vector<1x512xf32> to vector<8x512xf32>
    %23 = arith.addf %21, %22 : vector<8x512xf32>
    %cst_16 = arith.constant 0.000000e+00 : f32
    %24 = vector.broadcast %cst_16 : f32 to vector<8x512xf32>
    %25 = arith.maximumf %23, %24 : vector<8x512xf32>
    %26 = arith.truncf %25 : vector<8x512xf32> to vector<8x512xbf16>
    %c0_17 = arith.constant 0 : index
    %c0_18 = arith.constant 0 : index
    %27 = vector.load %arg5[%c0_17, %c0_18] : memref<512x128xbf16, #tpu.memory_space<vmem>>, vector<512x128xbf16>
    %cst_19 = arith.constant dense<0.000000e+00> : vector<8x128xf32>
    %28 = tpu.matmul %26, %27, %cst_19 {dimension_numbers = #tpu.dot_dimension_numbers<[1], [0], [0], [1], [0, 0, 1, 1], [], []>} : vector<8x512xbf16>, vector<512x128xbf16>, vector<8x128xf32> -> vector<8x128xf32>
    %29 = vector.broadcast %5 : vector<1x128xf32> to vector<8x128xf32>
    %30 = arith.addf %28, %29 : vector<8x128xf32>
    %c0_20 = arith.constant 0 : index
    %c0_21 = arith.constant 0 : index
    %31 = vector.load %arg7[%c0_20, %c0_21] : memref<8x128xf32, #tpu.memory_space<vmem>>, vector<8x128xf32>
    tpu.vector_store %arg7[%c0_20, %c0_21], %30 {strides = array<i32>} : memref<8x128xf32, #tpu.memory_space<vmem>>, vector<8x128xf32>,
    return
  }
  func.func @transform_0(%arg0: i32) -> (i32, i32) {
    %c0_i32 = arith.constant 0 : i32
    %c0_i32_0 = arith.constant 0 : i32
    return %arg0, %c0_i32 : i32, i32
  }
  func.func @transform_1(%arg0: i32) -> (i32, i32) {
    %c0_i32 = arith.constant 0 : i32
    %c0_i32_0 = arith.constant 0 : i32
    %c0_i32_1 = arith.constant 0 : i32
    return %c0_i32, %c0_i32_0 : i32, i32
  }
  func.func @transform_2(%arg0: i32) -> (i32, i32) {
    %c0_i32 = arith.constant 0 : i32
    %c0_i32_0 = arith.constant 0 : i32
    %c0_i32_1 = arith.constant 0 : i32
    return %c0_i32, %c0_i32_0 : i32, i32
  }
  func.func @transform_3(%arg0: i32) -> (i32, i32) {
    %c0_i32 = arith.constant 0 : i32
    %c0_i32_0 = arith.constant 0 : i32
    %c0_i32_1 = arith.constant 0 : i32
    return %c0_i32, %c0_i32_0 : i32, i32
  }
  func.func @transform_4(%arg0: i32) -> (i32, i32) {
    %c0_i32 = arith.constant 0 : i32
    %c0_i32_0 = arith.constant 0 : i32
    %c0_i32_1 = arith.constant 0 : i32
    return %c0_i32, %c0_i32_0 : i32, i32
  }
  func.func @transform_5(%arg0: i32) -> (i32, i32) {
    %c0_i32 = arith.constant 0 : i32
    %c0_i32_0 = arith.constant 0 : i32
    %c0_i32_1 = arith.constant 0 : i32
    return %c0_i32, %c0_i32_0 : i32, i32
  }
  func.func @transform_6(%arg0: i32) -> (i32, i32) {
    %c0_i32 = arith.constant 0 : i32
    %c0_i32_0 = arith.constant 0 : i32
    return %arg0, %c0_i32 : i32, i32
  }
}

</mosaic_0001>

<llo_original>
// kernel: linear_model_forward.1
$region0: #{linear_model_forward.1}
  #allocation0 [shape = 'u32[]', space=smem, size = 0x4, offset = 0x4, fixed_abs, tag = 'smem constant byte address 0x4 - core index']
  #allocation1 [shape = 'u32[72,128]{1,0:T(1,128)}', space=vmem, size = 0x9000, scoped, tag = 'internal scratch']
  %s0 = inlined_call_operand.vmem [shape: f32[8,20], index: 0, kind: input, shape index: {}]
  %s1 = inlined_call_operand.vmem [shape: bf16[20,128], index: 1, kind: input, shape index: {}]
  %s2 = inlined_call_operand.hbm [shape: bf16[128,512], index: 2, kind: input, shape index: {}]
  %s3 = inlined_call_operand.hbm [shape: bf16[512,512], index: 3, kind: input, shape index: {}]
  %s4 = inlined_call_operand.hbm [shape: bf16[512,128], index: 4, kind: input, shape index: {}]
  %s5 = inlined_call_operand.hbm [shape: f32[4,512], index: 5, kind: input, shape index: {}]
  %s6 = inlined_call_operand.vmem [shape: f32[8,128], index: 6, kind: output, shape index: {}]
  %s7 = sld [smem:[#allocation0]]
  $region50: #{linear_model_forward.1} parent=0
    _
  %s9 = ssub.s32 1, %s7
  %s10 = scalar_select 0, %s9, %s7
  $region1: #{linear_model_forward.1} parent=0
    #allocation2 [shape = 'u8[131072]{0}', space=vmem, size = 0x20000, scoped, tag = 'input window, operand 2, single buffered']
    #allocation3 [shape = 's32[1]{0}', space=sflag, size = 0x4, scoped, tag = 'scoped memory for linear_model_forward.1']
    #allocation4 [shape = 'u8[524288]{0}', space=vmem, size = 0x80000, scoped, tag = 'input window, operand 3, single buffered']
    #allocation5 [shape = 's32[1]{0}', space=sflag, size = 0x4, scoped, tag = 'scoped memory for linear_model_forward.1']
    #allocation6 [shape = 'u8[131072]{0}', space=vmem, size = 0x20000, scoped, tag = 'input window, operand 4, single buffered']
    #allocation7 [shape = 'u8[8192]{0}', space=vmem, size = 0x2000, scoped, tag = 'input window, operand 5, single buffered']
    #allocation8 [shape = 's32[1]{0}', space=sflag, size = 0x4, scoped, tag = 'scoped memory for linear_model_forward.1']
    %11 = vsyncpa [#allocation3], 0
    %12 = vsyncpa [#allocation5], 0
    %13 = vsyncpa [#allocation8], 0
    // Predicated region
    $region2: #{linear_model_forward.1} parent=1 // pred_check
      _
    $region3: #{linear_model_forward.1} parent=1 // pred_check_branch
      %15 = sbr.rel (0) target = $region5
    $region4: #{linear_model_forward.1} parent=1 // pred_region
      _
    $region5: #{linear_model_forward.1} parent=1 // pred_fallthru
      _
    // Predicated region
    $region6: #{linear_model_forward.1} parent=1 // pred_check
      _
    $region7: #{linear_model_forward.1} parent=1 // pred_check_branch
      %17 = sbr.rel (0) target = $region9
    $region8: #{linear_model_forward.1} parent=1 // pred_region
      _
    $region9: #{linear_model_forward.1} parent=1 // pred_fallthru
      _
    // Predicated region
    $region10: #{linear_model_forward.1} parent=1 // pred_check
      _
    $region11: #{linear_model_forward.1} parent=1 // pred_check_branch
      %19 = sbr.rel (0) target = $region13
    $region12: #{linear_model_forward.1} parent=1 // pred_region
      %21 = vsyncadd [#allocation3], 0
      %s22 = sshll.u32 %s2, 4
      %s23 = int_to_ptr.hbm [resolvable:$true] %s22
      %s24 = sshll.u32 [#allocation2], 4
      %s25 = int_to_ptr.vmem [resolvable:$true] %s24
      %30 = dma.hbm_to_vmem [thread:$0]  %s23, 4096, %s25, [#allocation3], 256, 256, 16
    $region13: #{linear_model_forward.1} parent=1 // pred_fallthru
      _
    // Predicated region
    $region14: #{linear_model_forward.1} parent=1 // pred_check
      _
    $region15: #{linear_model_forward.1} parent=1 // pred_check_branch
      %32 = sbr.rel (0) target = $region17
    $region16: #{linear_model_forward.1} parent=1 // pred_region
      %34 = vsyncadd [#allocation5], 0
      %s35 = sshll.u32 %s3, 4
      %s36 = int_to_ptr.hbm [resolvable:$true] %s35
      %s37 = sshll.u32 [#allocation4], 4
      %s38 = int_to_ptr.vmem [resolvable:$true] %s37
      %43 = dma.hbm_to_vmem [thread:$0]  %s36, 16384, %s38, [#allocation5], 256, 256, 16
    $region17: #{linear_model_forward.1} parent=1 // pred_fallthru
      _
    // Predicated region
    $region18: #{linear_model_forward.1} parent=1 // pred_check
      _
    $region19: #{linear_model_forward.1} parent=1 // pred_check_branch
      %45 = sbr.rel (0) target = $region21
    $region20: #{linear_model_forward.1} parent=1 // pred_region
      %47 = vsyncadd [#allocation5], 0
      %s48 = sshll.u32 %s4, 4
      %s49 = int_to_ptr.hbm [resolvable:$true] %s48
      %s50 = sshll.u32 [#allocation6], 4
      %s51 = int_to_ptr.vmem [resolvable:$true] %s50
      %56 = dma.hbm_to_vmem [thread:$0]  %s49, 4096, %s51, [#allocation5], 64, 64, 4
    $region21: #{linear_model_forward.1} parent=1 // pred_fallthru
      _
    // Predicated region
    $region22: #{linear_model_forward.1} parent=1 // pred_check
      _
    $region23: #{linear_model_forward.1} parent=1 // pred_check_branch
      %58 = sbr.rel (0) target = $region25
    $region24: #{linear_model_forward.1} parent=1 // pred_region
      %60 = vsyncadd [#allocation8], 0
      %s62 = sshll.u32 %s5, 4
      %s63 = int_to_ptr.hbm [resolvable:$true] %s62
      %s64 = sshll.u32 [#allocation7], 4
      %s65 = int_to_ptr.vmem [resolvable:$true] %s64
      %67 = dma.hbm_to_vmem [thread:$0]  %s63, 256, %s65, [#allocation8]
    $region25: #{linear_model_forward.1} parent=1 // pred_fallthru
      _
    // Predicated region
    $region26: #{linear_model_forward.1} parent=1 // pred_check
      _
    $region27: #{linear_model_forward.1} parent=1 // pred_check_branch
      %69 = sbr.rel (0) target = $region29
    $region28: #{linear_model_forward.1} parent=1 // pred_region
      %71 = dma.done [#allocation3], 4096
    $region29: #{linear_model_forward.1} parent=1 // pred_fallthru
      _
    // Predicated region
    $region30: #{linear_model_forward.1} parent=1 // pred_check
      _
    $region31: #{linear_model_forward.1} parent=1 // pred_check_branch
      %73 = sbr.rel (0) target = $region33
    $region32: #{linear_model_forward.1} parent=1 // pred_region
      %75 = dma.done [#allocation5], 16384
    $region33: #{linear_model_forward.1} parent=1 // pred_fallthru
      _
    // Predicated region
    $region34: #{linear_model_forward.1} parent=1 // pred_check
      _
    $region35: #{linear_model_forward.1} parent=1 // pred_check_branch
      %77 = sbr.rel (0) target = $region37
    $region36: #{linear_model_forward.1} parent=1 // pred_region
      %79 = dma.done [#allocation5], 4096
    $region37: #{linear_model_forward.1} parent=1 // pred_fallthru
      _
    // Predicated region
    $region38: #{linear_model_forward.1} parent=1 // pred_check
      _
    $region39: #{linear_model_forward.1} parent=1 // pred_check_branch
      %81 = sbr.rel (0) target = $region41
    $region40: #{linear_model_forward.1} parent=1 // pred_region
      %83 = dma.done [#allocation8], 256
    $region41: #{linear_model_forward.1} parent=1 // pred_fallthru
      _
    %v85 = vld [vmem:[%s0] sm:$0xff]
    %v86 = vpack.c.bf16 %v85, %v85
    %v87 = vld [vmem:[#allocation7] sm:$0x1]
    %s88 = scalar_lea.vmem [#allocation7], 1
    %v89 = vld [vmem:[%s88] ss:$4 sm:$0xf]
    %s90 = scalar_lea.vmem [#allocation7], 2
    %v91 = vld [vmem:[%s90] ss:$4 sm:$0xf]
    %v92 = vld [vmem:[#allocation7 + $0x3] sm:$0x1]
    %v93 = vld [vmem:[%s1] sm:$0xf]
    %v94 = vld [vmem:[%s1 + $0x4] sm:$0xf]
    %v95 = vld [vmem:[%s1 + $0x8] sm:$0x3]
    %v96 = vperm.slane %v87, 0
    %v100 = vunpack.c.l.b16 %v93
    %v101 = vunpack.c.l.b16 %v94
    %v102 = vunpack.c.l.b16 %v95
    %v103 = vpack.c.b16 %v101, %v100
    %v104 = vpack.c.b16 %v102, %v102
    %vm106 = vcmask 162816
    %v108 = vsel %vm106, %v86, 0
    %vm110 = vcmask 1041408
    %v112 = vsel %vm110, %v104, 0
    %114 = vmatpush.bf16.msra.mxu0 0
    %115 = vmatpush.bf16.msra.mxu0 0
    %116 = vmatpush.bf16.msra.mxu0 0
    %117 = vmatpush.bf16.msra.mxu0 0
    %118 = vmatpush.bf16.msra.mxu0 0
    %119 = vmatpush.bf16.msra.mxu0 0
    %120 = vmatpush.bf16.msra.mxu0 %v112
    %121 = vmatpush.bf16.msra.mxu0 %v103
    %122 = vmatmul.bf16.gmra.mxu0 %v108
    %v123 = vpop.f32.mrf.mxu0
    %v124 = vadd.f32 %v96, %v123
    %v125 = vpop.f32.mrf.mxu0
    %126 = vdwg.mxu0
    %v127 = vmax.f32 %v124, 0.0
    %v128 = vpack.c.bf16 %v127, %v127
    %v129 = vld [vmem:[#allocation2] sm:$0xff]
    %v130 = vld [vmem:[#allocation2 + $0x8] sm:$0xff]
    %v131 = vld [vmem:[#allocation2 + $0x10] sm:$0xff]
    %v132 = vld [vmem:[#allocation2 + $0x18] sm:$0xff]
    %v133 = vld [vmem:[#allocation2 + $0x20] sm:$0xff]
    %v134 = vld [vmem:[#allocation2 + $0x28] sm:$0xff]
    %v135 = vld [vmem:[#allocation2 + $0x30] sm:$0xff]
    %v136 = vld [vmem:[#allocation2 + $0x38] sm:$0xff]
    %v137 = vld [vmem:[#allocation2 + $0x40] sm:$0xff]
    %v138 = vld [vmem:[#allocation2 + $0x48] sm:$0xff]
    %v139 = vld [vmem:[#allocation2 + $0x50] sm:$0xff]
    %v140 = vld [vmem:[#allocation2 + $0x58] sm:$0xff]
    %v141 = vld [vmem:[#allocation2 + $0x60] sm:$0xff]
    %v142 = vld [vmem:[#allocation2 + $0x68] sm:$0xff]
    %v143 = vld [vmem:[#allocation2 + $0x70] sm:$0xff]
    %v144 = vld [vmem:[#allocation2 + $0x78] sm:$0xff]
    %v145 = vld [vmem:[#allocation2 + $0x80] sm:$0xff]
    %v146 = vld [vmem:[#allocation2 + $0x88] sm:$0xff]
    %v147 = vld [vmem:[#allocation2 + $0x90] sm:$0xff]
    %v148 = vld [vmem:[#allocation2 + $0x98] sm:$0xff]
    %v149 = vld [vmem:[#allocation2 + $0xa0] sm:$0xff]
    %v150 = vld [vmem:[#allocation2 + $0xa8] sm:$0xff]
    %v151 = vld [vmem:[#allocation2 + $0xb0] sm:$0xff]
    %v152 = vld [vmem:[#allocation2 + $0xb8] sm:$0xff]
    %v153 = vld [vmem:[#allocation2 + $0xc0] sm:$0xff]
    %v154 = vld [vmem:[#allocation2 + $0xc8] sm:$0xff]
    %v155 = vld [vmem:[#allocation2 + $0xd0] sm:$0xff]
    %v156 = vld [vmem:[#allocation2 + $0xd8] sm:$0xff]
    %v157 = vld [vmem:[#allocation2 + $0xe0] sm:$0xff]
    %v158 = vld [vmem:[#allocation2 + $0xe8] sm:$0xff]
    %v159 = vld [vmem:[#allocation2 + $0xf0] sm:$0xff]
    %v160 = vld [vmem:[#allocation2 + $0xf8] sm:$0xff]
    %v162 = vperm.slane %v89, 0
    %v163 = vperm.slane %v89, 1
    %v164 = vperm.slane %v89, 2
    %v165 = vperm.slane %v89, 3
    %v202 = vunpack.c.l.b16 %v129
    %v203 = vunpack.c.h.b16 %v129
    %v204 = vunpack.c.l.b16 %v130
    %v205 = vunpack.c.h.b16 %v130
    %v206 = vunpack.c.l.b16 %v131
    %v207 = vunpack.c.h.b16 %v131
    %v208 = vunpack.c.l.b16 %v132
    %v209 = vunpack.c.h.b16 %v132
    %v210 = vunpack.c.l.b16 %v133
    %v211 = vunpack.c.h.b16 %v133
    %v212 = vunpack.c.l.b16 %v134
    %v213 = vunpack.c.h.b16 %v134
    %v214 = vunpack.c.l.b16 %v135
    %v215 = vunpack.c.h.b16 %v135
    %v216 = vunpack.c.l.b16 %v136
    %v217 = vunpack.c.h.b16 %v136
    %v218 = vunpack.c.l.b16 %v137
    %v219 = vunpack.c.h.b16 %v137
    %v220 = vunpack.c.l.b16 %v138
    %v221 = vunpack.c.h.b16 %v138
    %v222 = vunpack.c.l.b16 %v139
    %v223 = vunpack.c.h.b16 %v139
    %v224 = vunpack.c.l.b16 %v140
    %v225 = vunpack.c.h.b16 %v140
    %v226 = vunpack.c.l.b16 %v141
    %v227 = vunpack.c.h.b16 %v141
    %v228 = vunpack.c.l.b16 %v142
    %v229 = vunpack.c.h.b16 %v142
    %v230 = vunpack.c.l.b16 %v143
    %v231 = vunpack.c.h.b16 %v143
    %v232 = vunpack.c.l.b16 %v144
    %v233 = vunpack.c.h.b16 %v144
    %v234 = vunpack.c.l.b16 %v145
    %v235 = vunpack.c.h.b16 %v145
    %v236 = vunpack.c.l.b16 %v146
    %v237 = vunpack.c.h.b16 %v146
    %v238 = vunpack.c.l.b16 %v147
    %v239 = vunpack.c.h.b16 %v147
    %v240 = vunpack.c.l.b16 %v148
    %v241 = vunpack.c.h.b16 %v148
    %v242 = vunpack.c.l.b16 %v149
    %v243 = vunpack.c.h.b16 %v149
    %v244 = vunpack.c.l.b16 %v150
    %v245 = vunpack.c.h.b16 %v150
    %v246 = vunpack.c.l.b16 %v151
    %v247 = vunpack.c.h.b16 %v151
    %v248 = vunpack.c.l.b16 %v152
    %v249 = vunpack.c.h.b16 %v152
    %v250 = vunpack.c.l.b16 %v153
    %v251 = vunpack.c.h.b16 %v153
    %v252 = vunpack.c.l.b16 %v154
    %v253 = vunpack.c.h.b16 %v154
    %v254 = vunpack.c.l.b16 %v155
    %v255 = vunpack.c.h.b16 %v155
    %v256 = vunpack.c.l.b16 %v156
    %v257 = vunpack.c.h.b16 %v156
    %v258 = vunpack.c.l.b16 %v157
    %v259 = vunpack.c.h.b16 %v157
    %v260 = vunpack.c.l.b16 %v158
    %v261 = vunpack.c.h.b16 %v158
    %v262 = vunpack.c.l.b16 %v159
    %v263 = vunpack.c.h.b16 %v159
    %v264 = vunpack.c.l.b16 %v160
    %v265 = vunpack.c.h.b16 %v160
    %v266 = vpack.c.b16 %v206, %v202
    %v267 = vpack.c.b16 %v207, %v203
    %v268 = vpack.c.b16 %v208, %v204
    %v269 = vpack.c.b16 %v209, %v205
    %v270 = vpack.c.b16 %v214, %v210
    %v271 = vpack.c.b16 %v215, %v211
    %v272 = vpack.c.b16 %v216, %v212
    %v273 = vpack.c.b16 %v217, %v213
    %v274 = vpack.c.b16 %v222, %v218
    %v275 = vpack.c.b16 %v223, %v219
    %v276 = vpack.c.b16 %v224, %v220
    %v277 = vpack.c.b16 %v225, %v221
    %v278 = vpack.c.b16 %v230, %v226
    %v279 = vpack.c.b16 %v231, %v227
    %v280 = vpack.c.b16 %v232, %v228
    %v281 = vpack.c.b16 %v233, %v229
    %v282 = vpack.c.b16 %v238, %v234
    %v283 = vpack.c.b16 %v239, %v235
    %v284 = vpack.c.b16 %v240, %v236
    %v285 = vpack.c.b16 %v241, %v237
    %v286 = vpack.c.b16 %v246, %v242
    %v287 = vpack.c.b16 %v247, %v243
    %v288 = vpack.c.b16 %v248, %v244
    %v289 = vpack.c.b16 %v249, %v245
    %v290 = vpack.c.b16 %v254, %v250
    %v291 = vpack.c.b16 %v255, %v251
    %v292 = vpack.c.b16 %v256, %v252
    %v293 = vpack.c.b16 %v257, %v253
    %v294 = vpack.c.b16 %v262, %v258
    %v295 = vpack.c.b16 %v263, %v259
    %v296 = vpack.c.b16 %v264, %v260
    %v297 = vpack.c.b16 %v265, %v261
    %330 = vmatpush.bf16.msra.mxu0 %v294
    %331 = vmatpush.bf16.msra.mxu0 %v290
    %332 = vmatpush.bf16.msra.mxu0 %v286
    %333 = vmatpush.bf16.msra.mxu0 %v282
    %334 = vmatpush.bf16.msra.mxu0 %v278
    %335 = vmatpush.bf16.msra.mxu0 %v274
    %336 = vmatpush.bf16.msra.mxu0 %v270
    %337 = vmatpush.bf16.msra.mxu0 %v266
    %338 = vmatmul.bf16.gmra.mxu0 %v128
    %v339 = vpop.f32.mrf.mxu0
    %v340 = vadd.f32 %v162, %v339
    %v341 = vpop.f32.mrf.mxu0
    %342 = vdwg.mxu0
    %343 = vmatpush.bf16.msra.mxu0 %v295
    %344 = vmatpush.bf16.msra.mxu0 %v291
    %345 = vmatpush.bf16.msra.mxu0 %v287
    %346 = vmatpush.bf16.msra.mxu0 %v283
    %347 = vmatpush.bf16.msra.mxu0 %v279
    %348 = vmatpush.bf16.msra.mxu0 %v275
    %349 = vmatpush.bf16.msra.mxu0 %v271
    %350 = vmatpush.bf16.msra.mxu0 %v267
    %351 = vmatmul.bf16.gmra.mxu0 %v128
    %v352 = vpop.f32.mrf.mxu0
    %v353 = vadd.f32 %v163, %v352
    %v354 = vpop.f32.mrf.mxu0
    %355 = vdwg.mxu0
    %356 = vmatpush.bf16.msra.mxu0 %v296
    %357 = vmatpush.bf16.msra.mxu0 %v292
    %358 = vmatpush.bf16.msra.mxu0 %v288
    %359 = vmatpush.bf16.msra.mxu0 %v284
    %360 = vmatpush.bf16.msra.mxu0 %v280
    %361 = vmatpush.bf16.msra.mxu0 %v276
    %362 = vmatpush.bf16.msra.mxu0 %v272
    %363 = vmatpush.bf16.msra.mxu0 %v268
    %364 = vmatmul.bf16.gmra.mxu0 %v128
    %v365 = vpop.f32.mrf.mxu0
    %v366 = vadd.f32 %v164, %v365
    %v367 = vpop.f32.mrf.mxu0
    %368 = vdwg.mxu0
    %369 = vmatpush.bf16.msra.mxu0 %v297
    %370 = vmatpush.bf16.msra.mxu0 %v293
    %371 = vmatpush.bf16.msra.mxu0 %v289
    %372 = vmatpush.bf16.msra.mxu0 %v285
    %373 = vmatpush.bf16.msra.mxu0 %v281
    %374 = vmatpush.bf16.msra.mxu0 %v277
    %375 = vmatpush.bf16.msra.mxu0 %v273
    %376 = vmatpush.bf16.msra.mxu0 %v269
    %377 = vmatmul.bf16.gmra.mxu0 %v128
    %v378 = vpop.f32.mrf.mxu0
    %v379 = vadd.f32 %v165, %v378
    %v380 = vpop.f32.mrf.mxu0
    %381 = vdwg.mxu0
    %v382 = vmax.f32 %v340, 0.0
    %v383 = vmax.f32 %v353, 0.0
    %v384 = vmax.f32 %v366, 0.0
    %v385 = vmax.f32 %v379, 0.0
    %v386 = vpack.c.bf16 %v382, %v382
    %v387 = vpack.c.bf16 %v383, %v383
    %v388 = vpack.c.bf16 %v384, %v384
    %v389 = vpack.c.bf16 %v385, %v385
    %v390 = vld [vmem:[#allocation4] sm:$0xff]
    %v391 = vld [vmem:[#allocation4 + $0x8] sm:$0xff]
    %v392 = vld [vmem:[#allocation4 + $0x10] sm:$0xff]
    %v393 = vld [vmem:[#allocation4 + $0x18] sm:$0xff]
    %v394 = vld [vmem:[#allocation4 + $0x20] sm:$0xff]
    %v395 = vld [vmem:[#allocation4 + $0x28] sm:$0xff]
    %v396 = vld [vmem:[#allocation4 + $0x30] sm:$0xff]
    %v397 = vld [vmem:[#allocation4 + $0x38] sm:$0xff]
    %v398 = vld [vmem:[#allocation4 + $0x40] sm:$0xff]
    %v399 = vld [vmem:[#allocation4 + $0x48] sm:$0xff]
    %v400 = vld [vmem:[#allocation4 + $0x50] sm:$0xff]
    %v401 = vld [vmem:[#allocation4 + $0x58] sm:$0xff]
    %v402 = vld [vmem:[#allocation4 + $0x60] sm:$0xff]
    %v403 = vld [vmem:[#allocation4 + $0x68] sm:$0xff]
    %v404 = vld [vmem:[#allocation4 + $0x70] sm:$0xff]
    %v405 = vld [vmem:[#allocation4 + $0x78] sm:$0xff]
    %v406 = vld [vmem:[#allocation4 + $0x80] sm:$0xff]
    %v407 = vld [vmem:[#allocation4 + $0x88] sm:$0xff]
    %v408 = vld [vmem:[#allocation4 + $0x90] sm:$0xff]
    %v409 = vld [vmem:[#allocation4 + $0x98] sm:$0xff]
    %v410 = vld [vmem:[#allocation4 + $0xa0] sm:$0xff]
    %v411 = vld [vmem:[#allocation4 + $0xa8] sm:$0xff]
    %v412 = vld [vmem:[#allocation4 + $0xb0] sm:$0xff]
    %v413 = vld [vmem:[#allocation4 + $0xb8] sm:$0xff]
    %v414 = vld [vmem:[#allocation4 + $0xc0] sm:$0xff]
    %v415 = vld [vmem:[#allocation4 + $0xc8] sm:$0xff]
    %v416 = vld [vmem:[#allocation4 + $0xd0] sm:$0xff]
    %v417 = vld [vmem:[#allocation4 + $0xd8] sm:$0xff]
    %v418 = vld [vmem:[#allocation4 + $0xe0] sm:$0xff]
    %v419 = vld [vmem:[#allocation4 + $0xe8] sm:$0xff]
    %v420 = vld [vmem:[#allocation4 + $0xf0] sm:$0xff]
    %v421 = vld [vmem:[#allocation4 + $0xf8] sm:$0xff]
    %v422 = vld [vmem:[#allocation4 + $0x100] sm:$0xff]
    %v423 = vld [vmem:[#allocation4 + $0x108] sm:$0xff]
    %v424 = vld [vmem:[#allocation4 + $0x110] sm:$0xff]
    %v425 = vld [vmem:[#allocation4 + $0x118] sm:$0xff]
    %v426 = vld [vmem:[#allocation4 + $0x120] sm:$0xff]
    %v427 = vld [vmem:[#allocation4 + $0x128] sm:$0xff]
    %v428 = vld [vmem:[#allocation4 + $0x130] sm:$0xff]
    %v429 = vld [vmem:[#allocation4 + $0x138] sm:$0xff]
    %v430 = vld [vmem:[#allocation4 + $0x140] sm:$0xff]
    %v431 = vld [vmem:[#allocation4 + $0x148] sm:$0xff]
    %v432 = vld [vmem:[#allocation4 + $0x150] sm:$0xff]
    %v433 = vld [vmem:[#allocation4 + $0x158] sm:$0xff]
    %v434 = vld [vmem:[#allocation4 + $0x160] sm:$0xff]
    %v435 = vld [vmem:[#allocation4 + $0x168] sm:$0xff]
    %v436 = vld [vmem:[#allocation4 + $0x170] sm:$0xff]
    %v437 = vld [vmem:[#allocation4 + $0x178] sm:$0xff]
    %v438 = vld [vmem:[#allocation4 + $0x180] sm:$0xff]
    %v439 = vld [vmem:[#allocation4 + $0x188] sm:$0xff]
    %v440 = vld [vmem:[#allocation4 + $0x190] sm:$0xff]
    %v441 = vld [vmem:[#allocation4 + $0x198] sm:$0xff]
    %v442 = vld [vmem:[#allocation4 + $0x1a0] sm:$0xff]
    %v443 = vld [vmem:[#allocation4 + $0x1a8] sm:$0xff]
    %v444 = vld [vmem:[#allocation4 + $0x1b0] sm:$0xff]
    %v445 = vld [vmem:[#allocation4 + $0x1b8] sm:$0xff]
    %v446 = vld [vmem:[#allocation4 + $0x1c0] sm:$0xff]
    %v447 = vld [vmem:[#allocation4 + $0x1c8] sm:$0xff]
    %v448 = vld [vmem:[#allocation4 + $0x1d0] sm:$0xff]
    %v449 = vld [vmem:[#allocation4 + $0x1d8] sm:$0xff]
    %v450 = vld [vmem:[#allocation4 + $0x1e0] sm:$0xff]
    %v451 = vld [vmem:[#allocation4 + $0x1e8] sm:$0xff]
    %v452 = vld [vmem:[#allocation4 + $0x1f0] sm:$0xff]
    %v453 = vld [vmem:[#allocation4 + $0x1f8] sm:$0xff]
    %v454 = vld [vmem:[#allocation4 + $0x200] sm:$0xff]
    %v455 = vld [vmem:[#allocation4 + $0x208] sm:$0xff]
    %v456 = vld [vmem:[#allocation4 + $0x210] sm:$0xff]
    %v457 = vld [vmem:[#allocation4 + $0x218] sm:$0xff]
    %v458 = vld [vmem:[#allocation4 + $0x220] sm:$0xff]
    %v459 = vld [vmem:[#allocation4 + $0x228] sm:$0xff]
    %v460 = vld [vmem:[#allocation4 + $0x230] sm:$0xff]
    %v461 = vld [vmem:[#allocation4 + $0x238] sm:$0xff]
    %v462 = vld [vmem:[#allocation4 + $0x240] sm:$0xff]
    %v463 = vld [vmem:[#allocation4 + $0x248] sm:$0xff]
    %v464 = vld [vmem:[#allocation4 + $0x250] sm:$0xff]
    %v465 = vld [vmem:[#allocation4 + $0x258] sm:$0xff]
    %v466 = vld [vmem:[#allocation4 + $0x260] sm:$0xff]
    %v467 = vld [vmem:[#allocation4 + $0x268] sm:$0xff]
    %v468 = vld [vmem:[#allocation4 + $0x270] sm:$0xff]
    %v469 = vld [vmem:[#allocation4 + $0x278] sm:$0xff]
    %v470 = vld [vmem:[#allocation4 + $0x280] sm:$0xff]
    %v471 = vld [vmem:[#allocation4 + $0x288] sm:$0xff]
    %v472 = vld [vmem:[#allocation4 + $0x290] sm:$0xff]
    %v473 = vld [vmem:[#allocation4 + $0x298] sm:$0xff]
    %v474 = vld [vmem:[#allocation4 + $0x2a0] sm:$0xff]
    %v475 = vld [vmem:[#allocation4 + $0x2a8] sm:$0xff]
    %v476 = vld [vmem:[#allocation4 + $0x2b0] sm:$0xff]
    %v477 = vld [vmem:[#allocation4 + $0x2b8] sm:$0xff]
    %v478 = vld [vmem:[#allocation4 + $0x2c0] sm:$0xff]
    %v479 = vld [vmem:[#allocation4 + $0x2c8] sm:$0xff]
    %v480 = vld [vmem:[#allocation4 + $0x2d0] sm:$0xff]
    %v481 = vld [vmem:[#allocation4 + $0x2d8] sm:$0xff]
    %v482 = vld [vmem:[#allocation4 + $0x2e0] sm:$0xff]
    %v483 = vld [vmem:[#allocation4 + $0x2e8] sm:$0xff]
    %v484 = vld [vmem:[#allocation4 + $0x2f0] sm:$0xff]
    %v485 = vld [vmem:[#allocation4 + $0x2f8] sm:$0xff]
    %v486 = vld [vmem:[#allocation4 + $0x300] sm:$0xff]
    %v487 = vld [vmem:[#allocation4 + $0x308] sm:$0xff]
    %v488 = vld [vmem:[#allocation4 + $0x310] sm:$0xff]
    %v489 = vld [vmem:[#allocation4 + $0x318] sm:$0xff]
    %v490 = vld [vmem:[#allocation4 + $0x320] sm:$0xff]
    %v491 = vld [vmem:[#allocation4 + $0x328] sm:$0xff]
    %v492 = vld [vmem:[#allocation4 + $0x330] sm:$0xff]
    %v493 = vld [vmem:[#allocation4 + $0x338] sm:$0xff]
    %v494 = vld [vmem:[#allocation4 + $0x340] sm:$0xff]
    %v495 = vld [vmem:[#allocation4 + $0x348] sm:$0xff]
    %v496 = vld [vmem:[#allocation4 + $0x350] sm:$0xff]
    %v497 = vld [vmem:[#allocation4 + $0x358] sm:$0xff]
    %v498 = vld [vmem:[#allocation4 + $0x360] sm:$0xff]
    %v499 = vld [vmem:[#allocation4 + $0x368] sm:$0xff]
    %v500 = vld [vmem:[#allocation4 + $0x370] sm:$0xff]
    %v501 = vld [vmem:[#allocation4 + $0x378] sm:$0xff]
    %v502 = vld [vmem:[#allocation4 + $0x380] sm:$0xff]
    %v503 = vld [vmem:[#allocation4 + $0x388] sm:$0xff]
    %v504 = vld [vmem:[#allocation4 + $0x390] sm:$0xff]
    %v505 = vld [vmem:[#allocation4 + $0x398] sm:$0xff]
    %v506 = vld [vmem:[#allocation4 + $0x3a0] sm:$0xff]
    %v507 = vld [vmem:[#allocation4 + $0x3a8] sm:$0xff]
    %v508 = vld [vmem:[#allocation4 + $0x3b0] sm:$0xff]
    %v509 = vld [vmem:[#allocation4 + $0x3b8] sm:$0xff]
    %v510 = vld [vmem:[#allocation4 + $0x3c0] sm:$0xff]
    %v511 = vld [vmem:[#allocation4 + $0x3c8] sm:$0xff]
    %v512 = vld [vmem:[#allocation4 + $0x3d0] sm:$0xff]
    %v513 = vld [vmem:[#allocation4 + $0x3d8] sm:$0xff]
    %v514 = vld [vmem:[#allocation4 + $0x3e0] sm:$0xff]
    %v515 = vld [vmem:[#allocation4 + $0x3e8] sm:$0xff]
    %v516 = vld [vmem:[#allocation4 + $0x3f0] sm:$0xff]
    %v517 = vld [vmem:[#allocation4 + $0x3f8] sm:$0xff]
    %v519 = vperm.slane %v91, 0
    %v520 = vperm.slane %v91, 1
    %v521 = vperm.slane %v91, 2
    %v522 = vperm.slane %v91, 3
    %v655 = vunpack.c.l.b16 %v390
    %v656 = vunpack.c.h.b16 %v390
    %v657 = vunpack.c.l.b16 %v391
    %v658 = vunpack.c.h.b16 %v391
    %v659 = vunpack.c.l.b16 %v392
    %v660 = vunpack.c.h.b16 %v392
    %v661 = vunpack.c.l.b16 %v393
    %v662 = vunpack.c.h.b16 %v393
    %v663 = vunpack.c.l.b16 %v394
    %v664 = vunpack.c.h.b16 %v394
    %v665 = vunpack.c.l.b16 %v395
    %v666 = vunpack.c.h.b16 %v395
    %v667 = vunpack.c.l.b16 %v396
    %v668 = vunpack.c.h.b16 %v396
    %v669 = vunpack.c.l.b16 %v397
    %v670 = vunpack.c.h.b16 %v397
    %v671 = vunpack.c.l.b16 %v398
    %v672 = vunpack.c.h.b16 %v398
    %v673 = vunpack.c.l.b16 %v399
    %v674 = vunpack.c.h.b16 %v399
    %v675 = vunpack.c.l.b16 %v400
    %v676 = vunpack.c.h.b16 %v400
    %v677 = vunpack.c.l.b16 %v401
    %v678 = vunpack.c.h.b16 %v401
    %v679 = vunpack.c.l.b16 %v402
    %v680 = vunpack.c.h.b16 %v402
    %v681 = vunpack.c.l.b16 %v403
    %v682 = vunpack.c.h.b16 %v403
    %v683 = vunpack.c.l.b16 %v404
    %v684 = vunpack.c.h.b16 %v404
    %v685 = vunpack.c.l.b16 %v405
    %v686 = vunpack.c.h.b16 %v405
    %v687 = vunpack.c.l.b16 %v406
    %v688 = vunpack.c.h.b16 %v406
    %v689 = vunpack.c.l.b16 %v407
    %v690 = vunpack.c.h.b16 %v407
    %v691 = vunpack.c.l.b16 %v408
    %v692 = vunpack.c.h.b16 %v408
    %v693 = vunpack.c.l.b16 %v409
    %v694 = vunpack.c.h.b16 %v409
    %v695 = vunpack.c.l.b16 %v410
    %v696 = vunpack.c.h.b16 %v410
    %v697 = vunpack.c.l.b16 %v411
    %v698 = vunpack.c.h.b16 %v411
    %v699 = vunpack.c.l.b16 %v412
    %v700 = vunpack.c.h.b16 %v412
    %v701 = vunpack.c.l.b16 %v413
    %v702 = vunpack.c.h.b16 %v413
    %v703 = vunpack.c.l.b16 %v414
    %v704 = vunpack.c.h.b16 %v414
    %v705 = vunpack.c.l.b16 %v415
    %v706 = vunpack.c.h.b16 %v415
    %v707 = vunpack.c.l.b16 %v416
    %v708 = vunpack.c.h.b16 %v416
    %v709 = vunpack.c.l.b16 %v417
    %v710 = vunpack.c.h.b16 %v417
    %v711 = vunpack.c.l.b16 %v418
    %v712 = vunpack.c.h.b16 %v418
    %v713 = vunpack.c.l.b16 %v419
    %v714 = vunpack.c.h.b16 %v419
    %v715 = vunpack.c.l.b16 %v420
    %v716 = vunpack.c.h.b16 %v420
    %v717 = vunpack.c.l.b16 %v421
    %v718 = vunpack.c.h.b16 %v421
    %v719 = vunpack.c.l.b16 %v422
    %v720 = vunpack.c.h.b16 %v422
    %v721 = vunpack.c.l.b16 %v423
    %v722 = vunpack.c.h.b16 %v423
    %v723 = vunpack.c.l.b16 %v424
    %v724 = vunpack.c.h.b16 %v424
    %v725 = vunpack.c.l.b16 %v425
    %v726 = vunpack.c.h.b16 %v425
    %v727 = vunpack.c.l.b16 %v426
    %v728 = vunpack.c.h.b16 %v426
    %v729 = vunpack.c.l.b16 %v427
    %v730 = vunpack.c.h.b16 %v427
    %v731 = vunpack.c.l.b16 %v428
    %v732 = vunpack.c.h.b16 %v428
    %v733 = vunpack.c.l.b16 %v429
    %v734 = vunpack.c.h.b16 %v429
    %v735 = vunpack.c.l.b16 %v430
    %v736 = vunpack.c.h.b16 %v430
    %v737 = vunpack.c.l.b16 %v431
    %v738 = vunpack.c.h.b16 %v431
    %v739 = vunpack.c.l.b16 %v432
    %v740 = vunpack.c.h.b16 %v432
    %v741 = vunpack.c.l.b16 %v433
    %v742 = vunpack.c.h.b16 %v433
    %v743 = vunpack.c.l.b16 %v434
    %v744 = vunpack.c.h.b16 %v434
    %v745 = vunpack.c.l.b16 %v435
    %v746 = vunpack.c.h.b16 %v435
    %v747 = vunpack.c.l.b16 %v436
    %v748 = vunpack.c.h.b16 %v436
    %v749 = vunpack.c.l.b16 %v437
    %v750 = vunpack.c.h.b16 %v437
    %v751 = vunpack.c.l.b16 %v438
    %v752 = vunpack.c.h.b16 %v438
    %v753 = vunpack.c.l.b16 %v439
    %v754 = vunpack.c.h.b16 %v439
    %v755 = vunpack.c.l.b16 %v440
    %v756 = vunpack.c.h.b16 %v440
    %v757 = vunpack.c.l.b16 %v441
    %v758 = vunpack.c.h.b16 %v441
    %v759 = vunpack.c.l.b16 %v442
    %v760 = vunpack.c.h.b16 %v442
    %v761 = vunpack.c.l.b16 %v443
    %v762 = vunpack.c.h.b16 %v443
    %v763 = vunpack.c.l.b16 %v444
    %v764 = vunpack.c.h.b16 %v444
    %v765 = vunpack.c.l.b16 %v445
    %v766 = vunpack.c.h.b16 %v445
    %v767 = vunpack.c.l.b16 %v446
    %v768 = vunpack.c.h.b16 %v446
    %v769 = vunpack.c.l.b16 %v447
    %v770 = vunpack.c.h.b16 %v447
    %v771 = vunpack.c.l.b16 %v448
    %v772 = vunpack.c.h.b16 %v448
    %v773 = vunpack.c.l.b16 %v449
    %v774 = vunpack.c.h.b16 %v449
    %v775 = vunpack.c.l.b16 %v450
    %v776 = vunpack.c.h.b16 %v450
    %v777 = vunpack.c.l.b16 %v451
    %v778 = vunpack.c.h.b16 %v451
    %v779 = vunpack.c.l.b16 %v452
    %v780 = vunpack.c.h.b16 %v452
    %v781 = vunpack.c.l.b16 %v453
    %v782 = vunpack.c.h.b16 %v453
    %v783 = vunpack.c.l.b16 %v454
    %v784 = vunpack.c.h.b16 %v454
    %v785 = vunpack.c.l.b16 %v455
    %v786 = vunpack.c.h.b16 %v455
    %v787 = vunpack.c.l.b16 %v456
    %v788 = vunpack.c.h.b16 %v456
    %v789 = vunpack.c.l.b16 %v457
    %v790 = vunpack.c.h.b16 %v457
    %v791 = vunpack.c.l.b16 %v458
    %v792 = vunpack.c.h.b16 %v458
    %v793 = vunpack.c.l.b16 %v459
    %v794 = vunpack.c.h.b16 %v459
    %v795 = vunpack.c.l.b16 %v460
    %v796 = vunpack.c.h.b16 %v460
    %v797 = vunpack.c.l.b16 %v461
    %v798 = vunpack.c.h.b16 %v461
    %v799 = vunpack.c.l.b16 %v462
    %v800 = vunpack.c.h.b16 %v462
    %v801 = vunpack.c.l.b16 %v463
    %v802 = vunpack.c.h.b16 %v463
    %v803 = vunpack.c.l.b16 %v464
    %v804 = vunpack.c.h.b16 %v464
    %v805 = vunpack.c.l.b16 %v465
    %v806 = vunpack.c.h.b16 %v465
    %v807 = vunpack.c.l.b16 %v466
    %v808 = vunpack.c.h.b16 %v466
    %v809 = vunpack.c.l.b16 %v467
    %v810 = vunpack.c.h.b16 %v467
    %v811 = vunpack.c.l.b16 %v468
    %v812 = vunpack.c.h.b16 %v468
    %v813 = vunpack.c.l.b16 %v469
    %v814 = vunpack.c.h.b16 %v469
    %v815 = vunpack.c.l.b16 %v470
    %v816 = vunpack.c.h.b16 %v470
    %v817 = vunpack.c.l.b16 %v471
    %v818 = vunpack.c.h.b16 %v471
    %v819 = vunpack.c.l.b16 %v472
    %v820 = vunpack.c.h.b16 %v472
    %v821 = vunpack.c.l.b16 %v473
    %v822 = vunpack.c.h.b16 %v473
    %v823 = vunpack.c.l.b16 %v474
    %v824 = vunpack.c.h.b16 %v474
    %v825 = vunpack.c.l.b16 %v475
    %v826 = vunpack.c.h.b16 %v475
    %v827 = vunpack.c.l.b16 %v476
    %v828 = vunpack.c.h.b16 %v476
    %v829 = vunpack.c.l.b16 %v477
    %v830 = vunpack.c.h.b16 %v477
    %v831 = vunpack.c.l.b16 %v478
    %v832 = vunpack.c.h.b16 %v478
    %v833 = vunpack.c.l.b16 %v479
    %v834 = vunpack.c.h.b16 %v479
    %v835 = vunpack.c.l.b16 %v480
    %v836 = vunpack.c.h.b16 %v480
    %v837 = vunpack.c.l.b16 %v481
    %v838 = vunpack.c.h.b16 %v481
    %v839 = vunpack.c.l.b16 %v482
    %v840 = vunpack.c.h.b16 %v482
    %v841 = vunpack.c.l.b16 %v483
    %v842 = vunpack.c.h.b16 %v483
    %v843 = vunpack.c.l.b16 %v484
    %v844 = vunpack.c.h.b16 %v484
    %v845 = vunpack.c.l.b16 %v485
    %v846 = vunpack.c.h.b16 %v485
    %v847 = vunpack.c.l.b16 %v486
    %v848 = vunpack.c.h.b16 %v486
    %v849 = vunpack.c.l.b16 %v487
    %v850 = vunpack.c.h.b16 %v487
    %v851 = vunpack.c.l.b16 %v488
    %v852 = vunpack.c.h.b16 %v488
    %v853 = vunpack.c.l.b16 %v489
    %v854 = vunpack.c.h.b16 %v489
    %v855 = vunpack.c.l.b16 %v490
    %v856 = vunpack.c.h.b16 %v490
    %v857 = vunpack.c.l.b16 %v491
    %v858 = vunpack.c.h.b16 %v491
    %v859 = vunpack.c.l.b16 %v492
    %v860 = vunpack.c.h.b16 %v492
    %v861 = vunpack.c.l.b16 %v493
    %v862 = vunpack.c.h.b16 %v493
    %v863 = vunpack.c.l.b16 %v494
    %v864 = vunpack.c.h.b16 %v494
    %v865 = vunpack.c.l.b16 %v495
    %v866 = vunpack.c.h.b16 %v495
    %v867 = vunpack.c.l.b16 %v496
    %v868 = vunpack.c.h.b16 %v496
    %v869 = vunpack.c.l.b16 %v497
    %v870 = vunpack.c.h.b16 %v497
    %v871 = vunpack.c.l.b16 %v498
    %v872 = vunpack.c.h.b16 %v498
    %v873 = vunpack.c.l.b16 %v499
    %v874 = vunpack.c.h.b16 %v499
    %v875 = vunpack.c.l.b16 %v500
    %v876 = vunpack.c.h.b16 %v500
    %v877 = vunpack.c.l.b16 %v501
    %v878 = vunpack.c.h.b16 %v501
    %v879 = vunpack.c.l.b16 %v502
    %v880 = vunpack.c.h.b16 %v502
    %v881 = vunpack.c.l.b16 %v503
    %v882 = vunpack.c.h.b16 %v503
    %v883 = vunpack.c.l.b16 %v504
    %v884 = vunpack.c.h.b16 %v504
    %v885 = vunpack.c.l.b16 %v505
    %v886 = vunpack.c.h.b16 %v505
    %v887 = vunpack.c.l.b16 %v506
    %v888 = vunpack.c.h.b16 %v506
    %v889 = vunpack.c.l.b16 %v507
    %v890 = vunpack.c.h.b16 %v507
    %v891 = vunpack.c.l.b16 %v508
    %v892 = vunpack.c.h.b16 %v508
    %v893 = vunpack.c.l.b16 %v509
    %v894 = vunpack.c.h.b16 %v509
    %v895 = vunpack.c.l.b16 %v510
    %v896 = vunpack.c.h.b16 %v510
    %v897 = vunpack.c.l.b16 %v511
    %v898 = vunpack.c.h.b16 %v511
    %v899 = vunpack.c.l.b16 %v512
    %v900 = vunpack.c.h.b16 %v512
    %v901 = vunpack.c.l.b16 %v513
    %v902 = vunpack.c.h.b16 %v513
    %v903 = vunpack.c.l.b16 %v514
    %v904 = vunpack.c.h.b16 %v514
    %v905 = vunpack.c.l.b16 %v515
    %v906 = vunpack.c.h.b16 %v515
    %v907 = vunpack.c.l.b16 %v516
    %v908 = vunpack.c.h.b16 %v516
    %v909 = vunpack.c.l.b16 %v517
    %v910 = vunpack.c.h.b16 %v517
    %v911 = vpack.c.b16 %v659, %v655
    %v912 = vpack.c.b16 %v660, %v656
    %v913 = vpack.c.b16 %v661, %v657
    %v914 = vpack.c.b16 %v662, %v658
    %v915 = vpack.c.b16 %v667, %v663
    %v916 = vpack.c.b16 %v668, %v664
    %v917 = vpack.c.b16 %v669, %v665
    %v918 = vpack.c.b16 %v670, %v666
    %v919 = vpack.c.b16 %v675, %v671
    %v920 = vpack.c.b16 %v676, %v672
    %v921 = vpack.c.b16 %v677, %v673
    %v922 = vpack.c.b16 %v678, %v674
    %v923 = vpack.c.b16 %v683, %v679
    %v924 = vpack.c.b16 %v684, %v680
    %v925 = vpack.c.b16 %v685, %v681
    %v926 = vpack.c.b16 %v686, %v682
    %v927 = vpack.c.b16 %v691, %v687
    %v928 = vpack.c.b16 %v692, %v688
    %v929 = vpack.c.b16 %v693, %v689
    %v930 = vpack.c.b16 %v694, %v690
    %v931 = vpack.c.b16 %v699, %v695
    %v932 = vpack.c.b16 %v700, %v696
    %v933 = vpack.c.b16 %v701, %v697
    %v934 = vpack.c.b16 %v702, %v698
    %v935 = vpack.c.b16 %v707, %v703
    %v936 = vpack.c.b16 %v708, %v704
    %v937 = vpack.c.b16 %v709, %v705
    %v938 = vpack.c.b16 %v710, %v706
    %v939 = vpack.c.b16 %v715, %v711
    %v940 = vpack.c.b16 %v716, %v712
    %v941 = vpack.c.b16 %v717, %v713
    %v942 = vpack.c.b16 %v718, %v714
    %v943 = vpack.c.b16 %v723, %v719
    %v944 = vpack.c.b16 %v724, %v720
    %v945 = vpack.c.b16 %v725, %v721
    %v946 = vpack.c.b16 %v726, %v722
    %v947 = vpack.c.b16 %v731, %v727
    %v948 = vpack.c.b16 %v732, %v728
    %v949 = vpack.c.b16 %v733, %v729
    %v950 = vpack.c.b16 %v734, %v730
    %v951 = vpack.c.b16 %v739, %v735
    %v952 = vpack.c.b16 %v740, %v736
    %v953 = vpack.c.b16 %v741, %v737
    %v954 = vpack.c.b16 %v742, %v738
    %v955 = vpack.c.b16 %v747, %v743
    %v956 = vpack.c.b16 %v748, %v744
    %v957 = vpack.c.b16 %v749, %v745
    %v958 = vpack.c.b16 %v750, %v746
    %v959 = vpack.c.b16 %v755, %v751
    %v960 = vpack.c.b16 %v756, %v752
    %v961 = vpack.c.b16 %v757, %v753
    %v962 = vpack.c.b16 %v758, %v754
    %v963 = vpack.c.b16 %v763, %v759
    %v964 = vpack.c.b16 %v764, %v760
    %v965 = vpack.c.b16 %v765, %v761
    %v966 = vpack.c.b16 %v766, %v762
    %v967 = vpack.c.b16 %v771, %v767
    %v968 = vpack.c.b16 %v772, %v768
    %v969 = vpack.c.b16 %v773, %v769
    %v970 = vpack.c.b16 %v774, %v770
    %v971 = vpack.c.b16 %v779, %v775
    %v972 = vpack.c.b16 %v780, %v776
    %v973 = vpack.c.b16 %v781, %v777
    %v974 = vpack.c.b16 %v782, %v778
    %v975 = vpack.c.b16 %v787, %v783
    %v976 = vpack.c.b16 %v788, %v784
    %v977 = vpack.c.b16 %v789, %v785
    %v978 = vpack.c.b16 %v790, %v786
    %v979 = vpack.c.b16 %v795, %v791
    %v980 = vpack.c.b16 %v796, %v792
    %v981 = vpack.c.b16 %v797, %v793
    %v982 = vpack.c.b16 %v798, %v794
    %v983 = vpack.c.b16 %v803, %v799
    %v984 = vpack.c.b16 %v804, %v800
    %v985 = vpack.c.b16 %v805, %v801
    %v986 = vpack.c.b16 %v806, %v802
    %v987 = vpack.c.b16 %v811, %v807
    %v988 = vpack.c.b16 %v812, %v808
    %v989 = vpack.c.b16 %v813, %v809
    %v990 = vpack.c.b16 %v814, %v810
    %v991 = vpack.c.b16 %v819, %v815
    %v992 = vpack.c.b16 %v820, %v816
    %v993 = vpack.c.b16 %v821, %v817
    %v994 = vpack.c.b16 %v822, %v818
    %v995 = vpack.c.b16 %v827, %v823
    %v996 = vpack.c.b16 %v828, %v824
    %v997 = vpack.c.b16 %v829, %v825
    %v998 = vpack.c.b16 %v830, %v826
    %v999 = vpack.c.b16 %v835, %v831
    %v1000 = vpack.c.b16 %v836, %v832
    %v1001 = vpack.c.b16 %v837, %v833
    %v1002 = vpack.c.b16 %v838, %v834
    %v1003 = vpack.c.b16 %v843, %v839
    %v1004 = vpack.c.b16 %v844, %v840
    %v1005 = vpack.c.b16 %v845, %v841
    %v1006 = vpack.c.b16 %v846, %v842
    %v1007 = vpack.c.b16 %v851, %v847
    %v1008 = vpack.c.b16 %v852, %v848
    %v1009 = vpack.c.b16 %v853, %v849
    %v1010 = vpack.c.b16 %v854, %v850
    %v1011 = vpack.c.b16 %v859, %v855
    %v1012 = vpack.c.b16 %v860, %v856
    %v1013 = vpack.c.b16 %v861, %v857
    %v1014 = vpack.c.b16 %v862, %v858
    %v1015 = vpack.c.b16 %v867, %v863
    %v1016 = vpack.c.b16 %v868, %v864
    %v1017 = vpack.c.b16 %v869, %v865
    %v1018 = vpack.c.b16 %v870, %v866
    %v1019 = vpack.c.b16 %v875, %v871
    %v1020 = vpack.c.b16 %v876, %v872
    %v1021 = vpack.c.b16 %v877, %v873
    %v1022 = vpack.c.b16 %v878, %v874
    %v1023 = vpack.c.b16 %v883, %v879
    %v1024 = vpack.c.b16 %v884, %v880
    %v1025 = vpack.c.b16 %v885, %v881
    %v1026 = vpack.c.b16 %v886, %v882
    %v1027 = vpack.c.b16 %v891, %v887
    %v1028 = vpack.c.b16 %v892, %v888
    %v1029 = vpack.c.b16 %v893, %v889
    %v1030 = vpack.c.b16 %v894, %v890
    %v1031 = vpack.c.b16 %v899, %v895
    %v1032 = vpack.c.b16 %v900, %v896
    %v1033 = vpack.c.b16 %v901, %v897
    %v1034 = vpack.c.b16 %v902, %v898
    %v1035 = vpack.c.b16 %v907, %v903
    %v1036 = vpack.c.b16 %v908, %v904
    %v1037 = vpack.c.b16 %v909, %v905
    %v1038 = vpack.c.b16 %v910, %v906
    %1167 = vmatpush.bf16.msra.mxu0 %v939
    %1168 = vmatpush.bf16.msra.mxu0 %v935
    %1169 = vmatpush.bf16.msra.mxu0 %v931
    %1170 = vmatpush.bf16.msra.mxu0 %v927
    %1171 = vmatpush.bf16.msra.mxu0 %v923
    %1172 = vmatpush.bf16.msra.mxu0 %v919
    %1173 = vmatpush.bf16.msra.mxu0 %v915
    %1174 = vmatpush.bf16.msra.mxu0 %v911
    %1175 = vmatmul.bf16.gmra.mxu0 %v386
    %v1176 = vpop.f32.mrf.mxu0
    %v1177 = vadd.f32 %v519, %v1176
    %v1178 = vpop.f32.mrf.mxu0
    %1179 = vdwg.mxu0
    %1180 = vmatpush.bf16.msra.mxu0 %v971
    %1181 = vmatpush.bf16.msra.mxu0 %v967
    %1182 = vmatpush.bf16.msra.mxu0 %v963
    %1183 = vmatpush.bf16.msra.mxu0 %v959
    %1184 = vmatpush.bf16.msra.mxu0 %v955
    %1185 = vmatpush.bf16.msra.mxu0 %v951
    %1186 = vmatpush.bf16.msra.mxu0 %v947
    %1187 = vmatpush.bf16.msra.mxu0 %v943
    %1188 = vmatmul.bf16.gmra.mxu0 %v387
    %v1189 = vpop.f32.mrf.mxu0
    %v1190 = vadd.f32 %v1177, %v1189
    %v1191 = vpop.f32.mrf.mxu0
    %1192 = vdwg.mxu0
    %1193 = vmatpush.bf16.msra.mxu0 %v1003
    %1194 = vmatpush.bf16.msra.mxu0 %v999
    %1195 = vmatpush.bf16.msra.mxu0 %v995
    %1196 = vmatpush.bf16.msra.mxu0 %v991
    %1197 = vmatpush.bf16.msra.mxu0 %v987
    %1198 = vmatpush.bf16.msra.mxu0 %v983
    %1199 = vmatpush.bf16.msra.mxu0 %v979
    %1200 = vmatpush.bf16.msra.mxu0 %v975
    %1201 = vmatmul.bf16.gmra.mxu0 %v388
    %v1202 = vpop.f32.mrf.mxu0
    %v1203 = vadd.f32 %v1190, %v1202
    %v1204 = vpop.f32.mrf.mxu0
    %1205 = vdwg.mxu0
    %1206 = vmatpush.bf16.msra.mxu0 %v1035
    %1207 = vmatpush.bf16.msra.mxu0 %v1031
    %1208 = vmatpush.bf16.msra.mxu0 %v1027
    %1209 = vmatpush.bf16.msra.mxu0 %v1023
    %1210 = vmatpush.bf16.msra.mxu0 %v1019
    %1211 = vmatpush.bf16.msra.mxu0 %v1015
    %1212 = vmatpush.bf16.msra.mxu0 %v1011
    %1213 = vmatpush.bf16.msra.mxu0 %v1007
    %1214 = vmatmul.bf16.gmra.mxu0 %v389
    %v1215 = vpop.f32.mrf.mxu0
    %v1216 = vadd.f32 %v1203, %v1215
    %v1217 = vpop.f32.mrf.mxu0
    %1218 = vdwg.mxu0
    %1219 = vmatpush.bf16.msra.mxu0 %v940
    %1220 = vmatpush.bf16.msra.mxu0 %v936
    %1221 = vmatpush.bf16.msra.mxu0 %v932
    %1222 = vmatpush.bf16.msra.mxu0 %v928
    %1223 = vmatpush.bf16.msra.mxu0 %v924
    %1224 = vmatpush.bf16.msra.mxu0 %v920
    %1225 = vmatpush.bf16.msra.mxu0 %v916
    %1226 = vmatpush.bf16.msra.mxu0 %v912
    %1227 = vmatmul.bf16.gmra.mxu0 %v386
    %v1228 = vpop.f32.mrf.mxu0
    %v1229 = vadd.f32 %v520, %v1228
    %v1230 = vpop.f32.mrf.mxu0
    %1231 = vdwg.mxu0
    %1232 = vmatpush.bf16.msra.mxu0 %v972
    %1233 = vmatpush.bf16.msra.mxu0 %v968
    %1234 = vmatpush.bf16.msra.mxu0 %v964
    %1235 = vmatpush.bf16.msra.mxu0 %v960
    %1236 = vmatpush.bf16.msra.mxu0 %v956
    %1237 = vmatpush.bf16.msra.mxu0 %v952
    %1238 = vmatpush.bf16.msra.mxu0 %v948
    %1239 = vmatpush.bf16.msra.mxu0 %v944
    %1240 = vmatmul.bf16.gmra.mxu0 %v387
    %v1241 = vpop.f32.mrf.mxu0
    %v1242 = vadd.f32 %v1229, %v1241
    %v1243 = vpop.f32.mrf.mxu0
    %1244 = vdwg.mxu0
    %1245 = vmatpush.bf16.msra.mxu0 %v1004
    %1246 = vmatpush.bf16.msra.mxu0 %v1000
    %1247 = vmatpush.bf16.msra.mxu0 %v996
    %1248 = vmatpush.bf16.msra.mxu0 %v992
    %1249 = vmatpush.bf16.msra.mxu0 %v988
    %1250 = vmatpush.bf16.msra.mxu0 %v984
    %1251 = vmatpush.bf16.msra.mxu0 %v980
    %1252 = vmatpush.bf16.msra.mxu0 %v976
    %1253 = vmatmul.bf16.gmra.mxu0 %v388
    %v1254 = vpop.f32.mrf.mxu0
    %v1255 = vadd.f32 %v1242, %v1254
    %v1256 = vpop.f32.mrf.mxu0
    %1257 = vdwg.mxu0
    %1258 = vmatpush.bf16.msra.mxu0 %v1036
    %1259 = vmatpush.bf16.msra.mxu0 %v1032
    %1260 = vmatpush.bf16.msra.mxu0 %v1028
    %1261 = vmatpush.bf16.msra.mxu0 %v1024
    %1262 = vmatpush.bf16.msra.mxu0 %v1020
    %1263 = vmatpush.bf16.msra.mxu0 %v1016
    %1264 = vmatpush.bf16.msra.mxu0 %v1012
    %1265 = vmatpush.bf16.msra.mxu0 %v1008
    %1266 = vmatmul.bf16.gmra.mxu0 %v389
    %v1267 = vpop.f32.mrf.mxu0
    %v1268 = vadd.f32 %v1255, %v1267
    %v1269 = vpop.f32.mrf.mxu0
    %1270 = vdwg.mxu0
    %1271 = vmatpush.bf16.msra.mxu0 %v941
    %1272 = vmatpush.bf16.msra.mxu0 %v937
    %1273 = vmatpush.bf16.msra.mxu0 %v933
    %1274 = vmatpush.bf16.msra.mxu0 %v929
    %1275 = vmatpush.bf16.msra.mxu0 %v925
    %1276 = vmatpush.bf16.msra.mxu0 %v921
    %1277 = vmatpush.bf16.msra.mxu0 %v917
    %1278 = vmatpush.bf16.msra.mxu0 %v913
    %1279 = vmatmul.bf16.gmra.mxu0 %v386
    %v1280 = vpop.f32.mrf.mxu0
    %v1281 = vadd.f32 %v521, %v1280
    %v1282 = vpop.f32.mrf.mxu0
    %1283 = vdwg.mxu0
    %1284 = vmatpush.bf16.msra.mxu0 %v973
    %1285 = vmatpush.bf16.msra.mxu0 %v969
    %1286 = vmatpush.bf16.msra.mxu0 %v965
    %1287 = vmatpush.bf16.msra.mxu0 %v961
    %1288 = vmatpush.bf16.msra.mxu0 %v957
    %1289 = vmatpush.bf16.msra.mxu0 %v953
    %1290 = vmatpush.bf16.msra.mxu0 %v949
    %1291 = vmatpush.bf16.msra.mxu0 %v945
    %1292 = vmatmul.bf16.gmra.mxu0 %v387
    %v1293 = vpop.f32.mrf.mxu0
    %v1294 = vadd.f32 %v1281, %v1293
    %v1295 = vpop.f32.mrf.mxu0
    %1296 = vdwg.mxu0
    %1297 = vmatpush.bf16.msra.mxu0 %v1005
    %1298 = vmatpush.bf16.msra.mxu0 %v1001
    %1299 = vmatpush.bf16.msra.mxu0 %v997
    %1300 = vmatpush.bf16.msra.mxu0 %v993
    %1301 = vmatpush.bf16.msra.mxu0 %v989
    %1302 = vmatpush.bf16.msra.mxu0 %v985
    %1303 = vmatpush.bf16.msra.mxu0 %v981
    %1304 = vmatpush.bf16.msra.mxu0 %v977
    %1305 = vmatmul.bf16.gmra.mxu0 %v388
    %v1306 = vpop.f32.mrf.mxu0
    %v1307 = vadd.f32 %v1294, %v1306
    %v1308 = vpop.f32.mrf.mxu0
    %1309 = vdwg.mxu0
    %1310 = vmatpush.bf16.msra.mxu0 %v1037
    %1311 = vmatpush.bf16.msra.mxu0 %v1033
    %1312 = vmatpush.bf16.msra.mxu0 %v1029
    %1313 = vmatpush.bf16.msra.mxu0 %v1025
    %1314 = vmatpush.bf16.msra.mxu0 %v1021
    %1315 = vmatpush.bf16.msra.mxu0 %v1017
    %1316 = vmatpush.bf16.msra.mxu0 %v1013
    %1317 = vmatpush.bf16.msra.mxu0 %v1009
    %1318 = vmatmul.bf16.gmra.mxu0 %v389
    %v1319 = vpop.f32.mrf.mxu0
    %v1320 = vadd.f32 %v1307, %v1319
    %v1321 = vpop.f32.mrf.mxu0
    %1322 = vdwg.mxu0
    %1323 = vmatpush.bf16.msra.mxu0 %v942
    %1324 = vmatpush.bf16.msra.mxu0 %v938
    %1325 = vmatpush.bf16.msra.mxu0 %v934
    %1326 = vmatpush.bf16.msra.mxu0 %v930
    %1327 = vmatpush.bf16.msra.mxu0 %v926
    %1328 = vmatpush.bf16.msra.mxu0 %v922
    %1329 = vmatpush.bf16.msra.mxu0 %v918
    %1330 = vmatpush.bf16.msra.mxu0 %v914
    %1331 = vmatmul.bf16.gmra.mxu0 %v386
    %v1332 = vpop.f32.mrf.mxu0
    %v1333 = vadd.f32 %v522, %v1332
    %v1334 = vpop.f32.mrf.mxu0
    %1335 = vdwg.mxu0
    %1336 = vmatpush.bf16.msra.mxu0 %v974
    %1337 = vmatpush.bf16.msra.mxu0 %v970
    %1338 = vmatpush.bf16.msra.mxu0 %v966
    %1339 = vmatpush.bf16.msra.mxu0 %v962
    %1340 = vmatpush.bf16.msra.mxu0 %v958
    %1341 = vmatpush.bf16.msra.mxu0 %v954
    %1342 = vmatpush.bf16.msra.mxu0 %v950
    %1343 = vmatpush.bf16.msra.mxu0 %v946
    %1344 = vmatmul.bf16.gmra.mxu0 %v387
    %v1345 = vpop.f32.mrf.mxu0
    %v1346 = vadd.f32 %v1333, %v1345
    %v1347 = vpop.f32.mrf.mxu0
    %1348 = vdwg.mxu0
    %1349 = vmatpush.bf16.msra.mxu0 %v1006
    %1350 = vmatpush.bf16.msra.mxu0 %v1002
    %1351 = vmatpush.bf16.msra.mxu0 %v998
    %1352 = vmatpush.bf16.msra.mxu0 %v994
    %1353 = vmatpush.bf16.msra.mxu0 %v990
    %1354 = vmatpush.bf16.msra.mxu0 %v986
    %1355 = vmatpush.bf16.msra.mxu0 %v982
    %1356 = vmatpush.bf16.msra.mxu0 %v978
    %1357 = vmatmul.bf16.gmra.mxu0 %v388
    %v1358 = vpop.f32.mrf.mxu0
    %v1359 = vadd.f32 %v1346, %v1358
    %v1360 = vpop.f32.mrf.mxu0
    %1361 = vdwg.mxu0
    %1362 = vmatpush.bf16.msra.mxu0 %v1038
    %1363 = vmatpush.bf16.msra.mxu0 %v1034
    %1364 = vmatpush.bf16.msra.mxu0 %v1030
    %1365 = vmatpush.bf16.msra.mxu0 %v1026
    %1366 = vmatpush.bf16.msra.mxu0 %v1022
    %1367 = vmatpush.bf16.msra.mxu0 %v1018
    %1368 = vmatpush.bf16.msra.mxu0 %v1014
    %1369 = vmatpush.bf16.msra.mxu0 %v1010
    %1370 = vmatmul.bf16.gmra.mxu0 %v389
    %v1371 = vpop.f32.mrf.mxu0
    %v1372 = vadd.f32 %v1359, %v1371
    %v1373 = vpop.f32.mrf.mxu0
    %1374 = vdwg.mxu0
    %v1375 = vmax.f32 %v1216, 0.0
    %v1376 = vmax.f32 %v1268, 0.0
    %v1377 = vmax.f32 %v1320, 0.0
    %v1378 = vmax.f32 %v1372, 0.0
    %v1379 = vpack.c.bf16 %v1375, %v1375
    %v1380 = vpack.c.bf16 %v1376, %v1376
    %v1381 = vpack.c.bf16 %v1377, %v1377
    %v1382 = vpack.c.bf16 %v1378, %v1378
    %v1383 = vld [vmem:[#allocation6] sm:$0xf]
    %v1384 = vld [vmem:[#allocation6 + $0x4] sm:$0xf]
    %v1385 = vld [vmem:[#allocation6 + $0x8] sm:$0xf]
    %v1386 = vld [vmem:[#allocation6 + $0xc] sm:$0xf]
    %v1387 = vld [vmem:[#allocation6 + $0x10] sm:$0xf]
    %v1388 = vld [vmem:[#allocation6 + $0x14] sm:$0xf]
    %v1389 = vld [vmem:[#allocation6 + $0x18] sm:$0xf]
    %v1390 = vld [vmem:[#allocation6 + $0x1c] sm:$0xf]
    %v1391 = vld [vmem:[#allocation6 + $0x20] sm:$0xf]
    %v1392 = vld [vmem:[#allocation6 + $0x24] sm:$0xf]
    %v1393 = vld [vmem:[#allocation6 + $0x28] sm:$0xf]
    %v1394 = vld [vmem:[#allocation6 + $0x2c] sm:$0xf]
    %v1395 = vld [vmem:[#allocation6 + $0x30] sm:$0xf]
    %v1396 = vld [vmem:[#allocation6 + $0x34] sm:$0xf]
    %v1397 = vld [vmem:[#allocation6 + $0x38] sm:$0xf]
    %v1398 = vld [vmem:[#allocation6 + $0x3c] sm:$0xf]
    %v1399 = vld [vmem:[#allocation6 + $0x40] sm:$0xf]
    %v1400 = vld [vmem:[#allocation6 + $0x44] sm:$0xf]
    %v1401 = vld [vmem:[#allocation6 + $0x48] sm:$0xf]
    %v1402 = vld [vmem:[#allocation6 + $0x4c] sm:$0xf]
    %v1403 = vld [vmem:[#allocation6 + $0x50] sm:$0xf]
    %v1404 = vld [vmem:[#allocation6 + $0x54] sm:$0xf]
    %v1405 = vld [vmem:[#allocation6 + $0x58] sm:$0xf]
    %v1406 = vld [vmem:[#allocation6 + $0x5c] sm:$0xf]
    %v1407 = vld [vmem:[#allocation6 + $0x60] sm:$0xf]
    %v1408 = vld [vmem:[#allocation6 + $0x64] sm:$0xf]
    %v1409 = vld [vmem:[#allocation6 + $0x68] sm:$0xf]
    %v1410 = vld [vmem:[#allocation6 + $0x6c] sm:$0xf]
    %v1411 = vld [vmem:[#allocation6 + $0x70] sm:$0xf]
    %v1412 = vld [vmem:[#allocation6 + $0x74] sm:$0xf]
    %v1413 = vld [vmem:[#allocation6 + $0x78] sm:$0xf]
    %v1414 = vld [vmem:[#allocation6 + $0x7c] sm:$0xf]
    %v1415 = vld [vmem:[#allocation6 + $0x80] sm:$0xf]
    %v1416 = vld [vmem:[#allocation6 + $0x84] sm:$0xf]
    %v1417 = vld [vmem:[#allocation6 + $0x88] sm:$0xf]
    %v1418 = vld [vmem:[#allocation6 + $0x8c] sm:$0xf]
    %v1419 = vld [vmem:[#allocation6 + $0x90] sm:$0xf]
    %v1420 = vld [vmem:[#allocation6 + $0x94] sm:$0xf]
    %v1421 = vld [vmem:[#allocation6 + $0x98] sm:$0xf]
    %v1422 = vld [vmem:[#allocation6 + $0x9c] sm:$0xf]
    %v1423 = vld [vmem:[#allocation6 + $0xa0] sm:$0xf]
    %v1424 = vld [vmem:[#allocation6 + $0xa4] sm:$0xf]
    %v1425 = vld [vmem:[#allocation6 + $0xa8] sm:$0xf]
    %v1426 = vld [vmem:[#allocation6 + $0xac] sm:$0xf]
    %v1427 = vld [vmem:[#allocation6 + $0xb0] sm:$0xf]
    %v1428 = vld [vmem:[#allocation6 + $0xb4] sm:$0xf]
    %v1429 = vld [vmem:[#allocation6 + $0xb8] sm:$0xf]
    %v1430 = vld [vmem:[#allocation6 + $0xbc] sm:$0xf]
    %v1431 = vld [vmem:[#allocation6 + $0xc0] sm:$0xf]
    %v1432 = vld [vmem:[#allocation6 + $0xc4] sm:$0xf]
    %v1433 = vld [vmem:[#allocation6 + $0xc8] sm:$0xf]
    %v1434 = vld [vmem:[#allocation6 + $0xcc] sm:$0xf]
    %v1435 = vld [vmem:[#allocation6 + $0xd0] sm:$0xf]
    %v1436 = vld [vmem:[#allocation6 + $0xd4] sm:$0xf]
    %v1437 = vld [vmem:[#allocation6 + $0xd8] sm:$0xf]
    %v1438 = vld [vmem:[#allocation6 + $0xdc] sm:$0xf]
    %v1439 = vld [vmem:[#allocation6 + $0xe0] sm:$0xf]
    %v1440 = vld [vmem:[#allocation6 + $0xe4] sm:$0xf]
    %v1441 = vld [vmem:[#allocation6 + $0xe8] sm:$0xf]
    %v1442 = vld [vmem:[#allocation6 + $0xec] sm:$0xf]
    %v1443 = vld [vmem:[#allocation6 + $0xf0] sm:$0xf]
    %v1444 = vld [vmem:[#allocation6 + $0xf4] sm:$0xf]
    %v1445 = vld [vmem:[#allocation6 + $0xf8] sm:$0xf]
    %v1446 = vld [vmem:[#allocation6 + $0xfc] sm:$0xf]
    %v1447 = vperm.slane %v92, 0
    %v1512 = vunpack.c.l.b16 %v1383
    %v1513 = vunpack.c.l.b16 %v1384
    %v1514 = vunpack.c.l.b16 %v1385
    %v1515 = vunpack.c.l.b16 %v1386
    %v1516 = vunpack.c.l.b16 %v1387
    %v1517 = vunpack.c.l.b16 %v1388
    %v1518 = vunpack.c.l.b16 %v1389
    %v1519 = vunpack.c.l.b16 %v1390
    %v1520 = vunpack.c.l.b16 %v1391
    %v1521 = vunpack.c.l.b16 %v1392
    %v1522 = vunpack.c.l.b16 %v1393
    %v1523 = vunpack.c.l.b16 %v1394
    %v1524 = vunpack.c.l.b16 %v1395
    %v1525 = vunpack.c.l.b16 %v1396
    %v1526 = vunpack.c.l.b16 %v1397
    %v1527 = vunpack.c.l.b16 %v1398
    %v1528 = vunpack.c.l.b16 %v1399
    %v1529 = vunpack.c.l.b16 %v1400
    %v1530 = vunpack.c.l.b16 %v1401
    %v1531 = vunpack.c.l.b16 %v1402
    %v1532 = vunpack.c.l.b16 %v1403
    %v1533 = vunpack.c.l.b16 %v1404
    %v1534 = vunpack.c.l.b16 %v1405
    %v1535 = vunpack.c.l.b16 %v1406
    %v1536 = vunpack.c.l.b16 %v1407
    %v1537 = vunpack.c.l.b16 %v1408
    %v1538 = vunpack.c.l.b16 %v1409
    %v1539 = vunpack.c.l.b16 %v1410
    %v1540 = vunpack.c.l.b16 %v1411
    %v1541 = vunpack.c.l.b16 %v1412
    %v1542 = vunpack.c.l.b16 %v1413
    %v1543 = vunpack.c.l.b16 %v1414
    %v1544 = vunpack.c.l.b16 %v1415
    %v1545 = vunpack.c.l.b16 %v1416
    %v1546 = vunpack.c.l.b16 %v1417
    %v1547 = vunpack.c.l.b16 %v1418
    %v1548 = vunpack.c.l.b16 %v1419
    %v1549 = vunpack.c.l.b16 %v1420
    %v1550 = vunpack.c.l.b16 %v1421
    %v1551 = vunpack.c.l.b16 %v1422
    %v1552 = vunpack.c.l.b16 %v1423
    %v1553 = vunpack.c.l.b16 %v1424
    %v1554 = vunpack.c.l.b16 %v1425
    %v1555 = vunpack.c.l.b16 %v1426
    %v1556 = vunpack.c.l.b16 %v1427
    %v1557 = vunpack.c.l.b16 %v1428
    %v1558 = vunpack.c.l.b16 %v1429
    %v1559 = vunpack.c.l.b16 %v1430
    %v1560 = vunpack.c.l.b16 %v1431
    %v1561 = vunpack.c.l.b16 %v1432
    %v1562 = vunpack.c.l.b16 %v1433
    %v1563 = vunpack.c.l.b16 %v1434
    %v1564 = vunpack.c.l.b16 %v1435
    %v1565 = vunpack.c.l.b16 %v1436
    %v1566 = vunpack.c.l.b16 %v1437
    %v1567 = vunpack.c.l.b16 %v1438
    %v1568 = vunpack.c.l.b16 %v1439
    %v1569 = vunpack.c.l.b16 %v1440
    %v1570 = vunpack.c.l.b16 %v1441
    %v1571 = vunpack.c.l.b16 %v1442
    %v1572 = vunpack.c.l.b16 %v1443
    %v1573 = vunpack.c.l.b16 %v1444
    %v1574 = vunpack.c.l.b16 %v1445
    %v1575 = vunpack.c.l.b16 %v1446
    %v1576 = vpack.c.b16 %v1513, %v1512
    %v1577 = vpack.c.b16 %v1515, %v1514
    %v1578 = vpack.c.b16 %v1517, %v1516
    %v1579 = vpack.c.b16 %v1519, %v1518
    %v1580 = vpack.c.b16 %v1521, %v1520
    %v1581 = vpack.c.b16 %v1523, %v1522
    %v1582 = vpack.c.b16 %v1525, %v1524
    %v1583 = vpack.c.b16 %v1527, %v1526
    %v1584 = vpack.c.b16 %v1529, %v1528
    %v1585 = vpack.c.b16 %v1531, %v1530
    %v1586 = vpack.c.b16 %v1533, %v1532
    %v1587 = vpack.c.b16 %v1535, %v1534
    %v1588 = vpack.c.b16 %v1537, %v1536
    %v1589 = vpack.c.b16 %v1539, %v1538
    %v1590 = vpack.c.b16 %v1541, %v1540
    %v1591 = vpack.c.b16 %v1543, %v1542
    %v1592 = vpack.c.b16 %v1545, %v1544
    %v1593 = vpack.c.b16 %v1547, %v1546
    %v1594 = vpack.c.b16 %v1549, %v1548
    %v1595 = vpack.c.b16 %v1551, %v1550
    %v1596 = vpack.c.b16 %v1553, %v1552
    %v1597 = vpack.c.b16 %v1555, %v1554
    %v1598 = vpack.c.b16 %v1557, %v1556
    %v1599 = vpack.c.b16 %v1559, %v1558
    %v1600 = vpack.c.b16 %v1561, %v1560
    %v1601 = vpack.c.b16 %v1563, %v1562
    %v1602 = vpack.c.b16 %v1565, %v1564
    %v1603 = vpack.c.b16 %v1567, %v1566
    %v1604 = vpack.c.b16 %v1569, %v1568
    %v1605 = vpack.c.b16 %v1571, %v1570
    %v1606 = vpack.c.b16 %v1573, %v1572
    %v1607 = vpack.c.b16 %v1575, %v1574
    %1640 = vmatpush.bf16.msra.mxu0 %v1583
    %1641 = vmatpush.bf16.msra.mxu0 %v1582
    %1642 = vmatpush.bf16.msra.mxu0 %v1581
    %1643 = vmatpush.bf16.msra.mxu0 %v1580
    %1644 = vmatpush.bf16.msra.mxu0 %v1579
    %1645 = vmatpush.bf16.msra.mxu0 %v1578
    %1646 = vmatpush.bf16.msra.mxu0 %v1577
    %1647 = vmatpush.bf16.msra.mxu0 %v1576
    %1648 = vmatmul.bf16.gmra.mxu0 %v1379
    %v1649 = vpop.f32.mrf.mxu0
    %v1650 = vadd.f32 %v1447, %v1649
    %v1651 = vpop.f32.mrf.mxu0
    %1652 = vdwg.mxu0
    %1653 = vmatpush.bf16.msra.mxu0 %v1591
    %1654 = vmatpush.bf16.msra.mxu0 %v1590
    %1655 = vmatpush.bf16.msra.mxu0 %v1589
    %1656 = vmatpush.bf16.msra.mxu0 %v1588
    %1657 = vmatpush.bf16.msra.mxu0 %v1587
    %1658 = vmatpush.bf16.msra.mxu0 %v1586
    %1659 = vmatpush.bf16.msra.mxu0 %v1585
    %1660 = vmatpush.bf16.msra.mxu0 %v1584
    %1661 = vmatmul.bf16.gmra.mxu0 %v1380
    %v1662 = vpop.f32.mrf.mxu0
    %v1663 = vadd.f32 %v1650, %v1662
    %v1664 = vpop.f32.mrf.mxu0
    %1665 = vdwg.mxu0
    %1666 = vmatpush.bf16.msra.mxu0 %v1599
    %1667 = vmatpush.bf16.msra.mxu0 %v1598
    %1668 = vmatpush.bf16.msra.mxu0 %v1597
    %1669 = vmatpush.bf16.msra.mxu0 %v1596
    %1670 = vmatpush.bf16.msra.mxu0 %v1595
    %1671 = vmatpush.bf16.msra.mxu0 %v1594
    %1672 = vmatpush.bf16.msra.mxu0 %v1593
    %1673 = vmatpush.bf16.msra.mxu0 %v1592
    %1674 = vmatmul.bf16.gmra.mxu0 %v1381
    %v1675 = vpop.f32.mrf.mxu0
    %v1676 = vadd.f32 %v1663, %v1675
    %v1677 = vpop.f32.mrf.mxu0
    %1678 = vdwg.mxu0
    %1679 = vmatpush.bf16.msra.mxu0 %v1607
    %1680 = vmatpush.bf16.msra.mxu0 %v1606
    %1681 = vmatpush.bf16.msra.mxu0 %v1605
    %1682 = vmatpush.bf16.msra.mxu0 %v1604
    %1683 = vmatpush.bf16.msra.mxu0 %v1603
    %1684 = vmatpush.bf16.msra.mxu0 %v1602
    %1685 = vmatpush.bf16.msra.mxu0 %v1601
    %1686 = vmatpush.bf16.msra.mxu0 %v1600
    %1687 = vmatmul.bf16.gmra.mxu0 %v1382
    %v1688 = vpop.f32.mrf.mxu0
    %v1689 = vadd.f32 %v1676, %v1688
    %v1690 = vpop.f32.mrf.mxu0
    %1691 = vdwg.mxu0
    %1692 = vst [vmem:[%s6] sm:$0xff] %v1689
    // Predicated region
    $region42: #{linear_model_forward.1} parent=1 // pred_check
      _
    $region43: #{linear_model_forward.1} parent=1 // pred_check_branch
      %1694 = sbr.rel (0) target = $region45
    $region44: #{linear_model_forward.1} parent=1 // pred_region
      _
    $region45: #{linear_model_forward.1} parent=1 // pred_fallthru
      _
    // Predicated region
    $region46: #{linear_model_forward.1} parent=1 // pred_check
      _
    $region47: #{linear_model_forward.1} parent=1 // pred_check_branch
      %1696 = sbr.rel (0) target = $region49
    $region48: #{linear_model_forward.1} parent=1 // pred_region
      _
    $region49: #{linear_model_forward.1} parent=1 // pred_fallthru
      _
    %1697 = vsyncpa [#allocation3], 1
    %1698 = vsyncpa [#allocation5], 1
    %1699 = vsyncpa [#allocation8], 1

// kernel: linear_model_forward.1
$region0: #{linear_model_forward.1}
  #allocation0 [shape = 'u32[]', space=smem, size = 0x4, offset = 0x4, fixed_abs, tag = 'smem constant byte address 0x4 - core index']
  #allocation1 [shape = 'u32[72,128]{1,0:T(1,128)}', space=vmem, size = 0x9000, scoped, tag = 'internal scratch']
  %s0 = inlined_call_operand.vmem [shape: f32[8,20], index: 0, kind: input, shape index: {}]
  %s1 = inlined_call_operand.vmem [shape: bf16[20,128], index: 1, kind: input, shape index: {}]
  %s2 = inlined_call_operand.hbm [shape: bf16[128,512], index: 2, kind: input, shape index: {}]
  %s3 = inlined_call_operand.hbm [shape: bf16[512,512], index: 3, kind: input, shape index: {}]
  %s4 = inlined_call_operand.hbm [shape: bf16[512,128], index: 4, kind: input, shape index: {}]
  %s5 = inlined_call_operand.hbm [shape: f32[4,512], index: 5, kind: input, shape index: {}]
  %s6 = inlined_call_operand.vmem [shape: f32[8,128], index: 6, kind: output, shape index: {}]
  %s7 = sld [smem:[#allocation0]]
  $region50: #{linear_model_forward.1} parent=0
    _
  %s9 = ssub.s32 1, %s7
  %s10 = scalar_select 0, %s9, %s7
  $region1: #{linear_model_forward.1} parent=0
    #allocation2 [shape = 'u8[131072]{0}', space=vmem, size = 0x20000, scoped, tag = 'input window, operand 2, single buffered']
    #allocation3 [shape = 's32[1]{0}', space=sflag, size = 0x4, scoped, tag = 'scoped memory for linear_model_forward.1']
    #allocation4 [shape = 'u8[524288]{0}', space=vmem, size = 0x80000, scoped, tag = 'input window, operand 3, single buffered']
    #allocation5 [shape = 's32[1]{0}', space=sflag, size = 0x4, scoped, tag = 'scoped memory for linear_model_forward.1']
    #allocation6 [shape = 'u8[131072]{0}', space=vmem, size = 0x20000, scoped, tag = 'input window, operand 4, single buffered']
    #allocation7 [shape = 'u8[8192]{0}', space=vmem, size = 0x2000, scoped, tag = 'input window, operand 5, single buffered']
    #allocation8 [shape = 's32[1]{0}', space=sflag, size = 0x4, scoped, tag = 'scoped memory for linear_model_forward.1']
    %11 = vsyncpa [#allocation3], 0
    %12 = vsyncpa [#allocation5], 0
    %13 = vsyncpa [#allocation8], 0
    // Predicated region
    $region2: #{linear_model_forward.1} parent=1 // pred_check
      _
    $region3: #{linear_model_forward.1} parent=1 // pred_check_branch
      %15 = sbr.rel (0) target = $region5
    $region4: #{linear_model_forward.1} parent=1 // pred_region
      _
    $region5: #{linear_model_forward.1} parent=1 // pred_fallthru
      _
    // Predicated region
    $region6: #{linear_model_forward.1} parent=1 // pred_check
      _
    $region7: #{linear_model_forward.1} parent=1 // pred_check_branch
      %17 = sbr.rel (0) target = $region9
    $region8: #{linear_model_forward.1} parent=1 // pred_region
      _
    $region9: #{linear_model_forward.1} parent=1 // pred_fallthru
      _
    // Predicated region
    $region10: #{linear_model_forward.1} parent=1 // pred_check
      _
    $region11: #{linear_model_forward.1} parent=1 // pred_check_branch
      %19 = sbr.rel (0) target = $region13
    $region12: #{linear_model_forward.1} parent=1 // pred_region
      %21 = vsyncadd [#allocation3], 0
      %s22 = sshll.u32 %s2, 4
      %s23 = int_to_ptr.hbm [resolvable:$true] %s22
      %s24 = sshll.u32 [#allocation2], 4
      %s25 = int_to_ptr.vmem [resolvable:$true] %s24
      %30 = dma.hbm_to_vmem [thread:$0]  %s23, 4096, %s25, [#allocation3], 256, 256, 16
    $region13: #{linear_model_forward.1} parent=1 // pred_fallthru
      _
    // Predicated region
    $region14: #{linear_model_forward.1} parent=1 // pred_check
      _
    $region15: #{linear_model_forward.1} parent=1 // pred_check_branch
      %32 = sbr.rel (0) target = $region17
    $region16: #{linear_model_forward.1} parent=1 // pred_region
      %34 = vsyncadd [#allocation5], 0
      %s35 = sshll.u32 %s3, 4
      %s36 = int_to_ptr.hbm [resolvable:$true] %s35
      %s37 = sshll.u32 [#allocation4], 4
      %s38 = int_to_ptr.vmem [resolvable:$true] %s37
      %43 = dma.hbm_to_vmem [thread:$0]  %s36, 16384, %s38, [#allocation5], 256, 256, 16
    $region17: #{linear_model_forward.1} parent=1 // pred_fallthru
      _
    // Predicated region
    $region18: #{linear_model_forward.1} parent=1 // pred_check
      _
    $region19: #{linear_model_forward.1} parent=1 // pred_check_branch
      %45 = sbr.rel (0) target = $region21
    $region20: #{linear_model_forward.1} parent=1 // pred_region
      %47 = vsyncadd [#allocation5], 0
      %s48 = sshll.u32 %s4, 4
      %s49 = int_to_ptr.hbm [resolvable:$true] %s48
      %s50 = sshll.u32 [#allocation6], 4
      %s51 = int_to_ptr.vmem [resolvable:$true] %s50
      %56 = dma.hbm_to_vmem [thread:$0]  %s49, 4096, %s51, [#allocation5], 64, 64, 4
    $region21: #{linear_model_forward.1} parent=1 // pred_fallthru
      _
    // Predicated region
    $region22: #{linear_model_forward.1} parent=1 // pred_check
      _
    $region23: #{linear_model_forward.1} parent=1 // pred_check_branch
      %58 = sbr.rel (0) target = $region25
    $region24: #{linear_model_forward.1} parent=1 // pred_region
      %60 = vsyncadd [#allocation8], 0
      %s62 = sshll.u32 %s5, 4
      %s63 = int_to_ptr.hbm [resolvable:$true] %s62
      %s64 = sshll.u32 [#allocation7], 4
      %s65 = int_to_ptr.vmem [resolvable:$true] %s64
      %67 = dma.hbm_to_vmem [thread:$0]  %s63, 256, %s65, [#allocation8]
    $region25: #{linear_model_forward.1} parent=1 // pred_fallthru
      _
    // Predicated region
    $region26: #{linear_model_forward.1} parent=1 // pred_check
      _
    $region27: #{linear_model_forward.1} parent=1 // pred_check_branch
      %69 = sbr.rel (0) target = $region29
    $region28: #{linear_model_forward.1} parent=1 // pred_region
      %71 = dma.done [#allocation3], 4096
    $region29: #{linear_model_forward.1} parent=1 // pred_fallthru
      _
    // Predicated region
    $region30: #{linear_model_forward.1} parent=1 // pred_check
      _
    $region31: #{linear_model_forward.1} parent=1 // pred_check_branch
      %73 = sbr.rel (0) target = $region33
    $region32: #{linear_model_forward.1} parent=1 // pred_region
      %75 = dma.done [#allocation5], 16384
    $region33: #{linear_model_forward.1} parent=1 // pred_fallthru
      _
    // Predicated region
    $region34: #{linear_model_forward.1} parent=1 // pred_check
      _
    $region35: #{linear_model_forward.1} parent=1 // pred_check_branch
      %77 = sbr.rel (0) target = $region37
    $region36: #{linear_model_forward.1} parent=1 // pred_region
      %79 = dma.done [#allocation5], 4096
    $region37: #{linear_model_forward.1} parent=1 // pred_fallthru
      _
    // Predicated region
    $region38: #{linear_model_forward.1} parent=1 // pred_check
      _
    $region39: #{linear_model_forward.1} parent=1 // pred_check_branch
      %81 = sbr.rel (0) target = $region41
    $region40: #{linear_model_forward.1} parent=1 // pred_region
      %83 = dma.done [#allocation8], 256
    $region41: #{linear_model_forward.1} parent=1 // pred_fallthru
      _
    %v85 = vld [vmem:[%s0] sm:$0xff]
    %v86 = vpack.c.bf16 %v85, %v85
    %v87 = vld [vmem:[#allocation7] sm:$0x1]
    %s88 = scalar_lea.vmem [#allocation7], 1
    %v89 = vld [vmem:[%s88] ss:$4 sm:$0xf]
    %s90 = scalar_lea.vmem [#allocation7], 2
    %v91 = vld [vmem:[%s90] ss:$4 sm:$0xf]
    %v92 = vld [vmem:[#allocation7 + $0x3] sm:$0x1]
    %v93 = vld [vmem:[%s1] sm:$0xf]
    %v94 = vld [vmem:[%s1 + $0x4] sm:$0xf]
    %v95 = vld [vmem:[%s1 + $0x8] sm:$0x3]
    %v96 = vperm.slane %v87, 0
    %v100 = vunpack.c.l.b16 %v93
    %v101 = vunpack.c.l.b16 %v94
    %v102 = vunpack.c.l.b16 %v95
    %v103 = vpack.c.b16 %v101, %v100
    %v104 = vpack.c.b16 %v102, %v102
    %vm106 = vcmask 162816
    %v108 = vsel %vm106, %v86, 0
    %vm110 = vcmask 1041408
    %v112 = vsel %vm110, %v104, 0
    %114 = vmatpush.bf16.msra.mxu0 0
    %115 = vmatpush.bf16.msra.mxu0 0
    %116 = vmatpush.bf16.msra.mxu0 0
    %117 = vmatpush.bf16.msra.mxu0 0
    %118 = vmatpush.bf16.msra.mxu0 0
    %119 = vmatpush.bf16.msra.mxu0 0
    %120 = vmatpush.bf16.msra.mxu0 %v112
    %121 = vmatpush.bf16.msra.mxu0 %v103
    %122 = vmatmul.bf16.gmra.mxu0 %v108
    %v123 = vpop.f32.mrf.mxu0
    %v124 = vadd.f32 %v96, %v123
    %v125 = vpop.f32.mrf.mxu0
    %126 = vdwg.mxu0
    %v127 = vmax.f32 %v124, 0.0
    %v128 = vpack.c.bf16 %v127, %v127
    %v129 = vld [vmem:[#allocation2] sm:$0xff]
    %v130 = vld [vmem:[#allocation2 + $0x8] sm:$0xff]
    %v131 = vld [vmem:[#allocation2 + $0x10] sm:$0xff]
    %v132 = vld [vmem:[#allocation2 + $0x18] sm:$0xff]
    %v133 = vld [vmem:[#allocation2 + $0x20] sm:$0xff]
    %v134 = vld [vmem:[#allocation2 + $0x28] sm:$0xff]
    %v135 = vld [vmem:[#allocation2 + $0x30] sm:$0xff]
    %v136 = vld [vmem:[#allocation2 + $0x38] sm:$0xff]
    %v137 = vld [vmem:[#allocation2 + $0x40] sm:$0xff]
    %v138 = vld [vmem:[#allocation2 + $0x48] sm:$0xff]
    %v139 = vld [vmem:[#allocation2 + $0x50] sm:$0xff]
    %v140 = vld [vmem:[#allocation2 + $0x58] sm:$0xff]
    %v141 = vld [vmem:[#allocation2 + $0x60] sm:$0xff]
    %v142 = vld [vmem:[#allocation2 + $0x68] sm:$0xff]
    %v143 = vld [vmem:[#allocation2 + $0x70] sm:$0xff]
    %v144 = vld [vmem:[#allocation2 + $0x78] sm:$0xff]
    %v145 = vld [vmem:[#allocation2 + $0x80] sm:$0xff]
    %v146 = vld [vmem:[#allocation2 + $0x88] sm:$0xff]
    %v147 = vld [vmem:[#allocation2 + $0x90] sm:$0xff]
    %v148 = vld [vmem:[#allocation2 + $0x98] sm:$0xff]
    %v149 = vld [vmem:[#allocation2 + $0xa0] sm:$0xff]
    %v150 = vld [vmem:[#allocation2 + $0xa8] sm:$0xff]
    %v151 = vld [vmem:[#allocation2 + $0xb0] sm:$0xff]
    %v152 = vld [vmem:[#allocation2 + $0xb8] sm:$0xff]
    %v153 = vld [vmem:[#allocation2 + $0xc0] sm:$0xff]
    %v154 = vld [vmem:[#allocation2 + $0xc8] sm:$0xff]
    %v155 = vld [vmem:[#allocation2 + $0xd0] sm:$0xff]
    %v156 = vld [vmem:[#allocation2 + $0xd8] sm:$0xff]
    %v157 = vld [vmem:[#allocation2 + $0xe0] sm:$0xff]
    %v158 = vld [vmem:[#allocation2 + $0xe8] sm:$0xff]
    %v159 = vld [vmem:[#allocation2 + $0xf0] sm:$0xff]
    %v160 = vld [vmem:[#allocation2 + $0xf8] sm:$0xff]
    %v162 = vperm.slane %v89, 0
    %v163 = vperm.slane %v89, 1
    %v164 = vperm.slane %v89, 2
    %v165 = vperm.slane %v89, 3
    %v202 = vunpack.c.l.b16 %v129
    %v203 = vunpack.c.h.b16 %v129
    %v204 = vunpack.c.l.b16 %v130
    %v205 = vunpack.c.h.b16 %v130
    %v206 = vunpack.c.l.b16 %v131
    %v207 = vunpack.c.h.b16 %v131
    %v208 = vunpack.c.l.b16 %v132
    %v209 = vunpack.c.h.b16 %v132
    %v210 = vunpack.c.l.b16 %v133
    %v211 = vunpack.c.h.b16 %v133
    %v212 = vunpack.c.l.b16 %v134
    %v213 = vunpack.c.h.b16 %v134
    %v214 = vunpack.c.l.b16 %v135
    %v215 = vunpack.c.h.b16 %v135
    %v216 = vunpack.c.l.b16 %v136
    %v217 = vunpack.c.h.b16 %v136
    %v218 = vunpack.c.l.b16 %v137
    %v219 = vunpack.c.h.b16 %v137
    %v220 = vunpack.c.l.b16 %v138
    %v221 = vunpack.c.h.b16 %v138
    %v222 = vunpack.c.l.b16 %v139
    %v223 = vunpack.c.h.b16 %v139
    %v224 = vunpack.c.l.b16 %v140
    %v225 = vunpack.c.h.b16 %v140
    %v226 = vunpack.c.l.b16 %v141
    %v227 = vunpack.c.h.b16 %v141
    %v228 = vunpack.c.l.b16 %v142
    %v229 = vunpack.c.h.b16 %v142
    %v230 = vunpack.c.l.b16 %v143
    %v231 = vunpack.c.h.b16 %v143
    %v232 = vunpack.c.l.b16 %v144
    %v233 = vunpack.c.h.b16 %v144
    %v234 = vunpack.c.l.b16 %v145
    %v235 = vunpack.c.h.b16 %v145
    %v236 = vunpack.c.l.b16 %v146
    %v237 = vunpack.c.h.b16 %v146
    %v238 = vunpack.c.l.b16 %v147
    %v239 = vunpack.c.h.b16 %v147
    %v240 = vunpack.c.l.b16 %v148
    %v241 = vunpack.c.h.b16 %v148
    %v242 = vunpack.c.l.b16 %v149
    %v243 = vunpack.c.h.b16 %v149
    %v244 = vunpack.c.l.b16 %v150
    %v245 = vunpack.c.h.b16 %v150
    %v246 = vunpack.c.l.b16 %v151
    %v247 = vunpack.c.h.b16 %v151
    %v248 = vunpack.c.l.b16 %v152
    %v249 = vunpack.c.h.b16 %v152
    %v250 = vunpack.c.l.b16 %v153
    %v251 = vunpack.c.h.b16 %v153
    %v252 = vunpack.c.l.b16 %v154
    %v253 = vunpack.c.h.b16 %v154
    %v254 = vunpack.c.l.b16 %v155
    %v255 = vunpack.c.h.b16 %v155
    %v256 = vunpack.c.l.b16 %v156
    %v257 = vunpack.c.h.b16 %v156
    %v258 = vunpack.c.l.b16 %v157
    %v259 = vunpack.c.h.b16 %v157
    %v260 = vunpack.c.l.b16 %v158
    %v261 = vunpack.c.h.b16 %v158
    %v262 = vunpack.c.l.b16 %v159
    %v263 = vunpack.c.h.b16 %v159
    %v264 = vunpack.c.l.b16 %v160
    %v265 = vunpack.c.h.b16 %v160
    %v266 = vpack.c.b16 %v206, %v202
    %v267 = vpack.c.b16 %v207, %v203
    %v268 = vpack.c.b16 %v208, %v204
    %v269 = vpack.c.b16 %v209, %v205
    %v270 = vpack.c.b16 %v214, %v210
    %v271 = vpack.c.b16 %v215, %v211
    %v272 = vpack.c.b16 %v216, %v212
    %v273 = vpack.c.b16 %v217, %v213
    %v274 = vpack.c.b16 %v222, %v218
    %v275 = vpack.c.b16 %v223, %v219
    %v276 = vpack.c.b16 %v224, %v220
    %v277 = vpack.c.b16 %v225, %v221
    %v278 = vpack.c.b16 %v230, %v226
    %v279 = vpack.c.b16 %v231, %v227
    %v280 = vpack.c.b16 %v232, %v228
    %v281 = vpack.c.b16 %v233, %v229
    %v282 = vpack.c.b16 %v238, %v234
    %v283 = vpack.c.b16 %v239, %v235
    %v284 = vpack.c.b16 %v240, %v236
    %v285 = vpack.c.b16 %v241, %v237
    %v286 = vpack.c.b16 %v246, %v242
    %v287 = vpack.c.b16 %v247, %v243
    %v288 = vpack.c.b16 %v248, %v244
    %v289 = vpack.c.b16 %v249, %v245
    %v290 = vpack.c.b16 %v254, %v250
    %v291 = vpack.c.b16 %v255, %v251
    %v292 = vpack.c.b16 %v256, %v252
    %v293 = vpack.c.b16 %v257, %v253
    %v294 = vpack.c.b16 %v262, %v258
    %v295 = vpack.c.b16 %v263, %v259
    %v296 = vpack.c.b16 %v264, %v260
    %v297 = vpack.c.b16 %v265, %v261
    %330 = vmatpush.bf16.msra.mxu0 %v294
    %331 = vmatpush.bf16.msra.mxu0 %v290
    %332 = vmatpush.bf16.msra.mxu0 %v286
    %333 = vmatpush.bf16.msra.mxu0 %v282
    %334 = vmatpush.bf16.msra.mxu0 %v278
    %335 = vmatpush.bf16.msra.mxu0 %v274
    %336 = vmatpush.bf16.msra.mxu0 %v270
    %337 = vmatpush.bf16.msra.mxu0 %v266
    %338 = vmatmul.bf16.gmra.mxu0 %v128
    %v339 = vpop.f32.mrf.mxu0
    %v340 = vadd.f32 %v162, %v339
    %v341 = vpop.f32.mrf.mxu0
    %342 = vdwg.mxu0
    %343 = vmatpush.bf16.msra.mxu0 %v295
    %344 = vmatpush.bf16.msra.mxu0 %v291
    %345 = vmatpush.bf16.msra.mxu0 %v287
    %346 = vmatpush.bf16.msra.mxu0 %v283
    %347 = vmatpush.bf16.msra.mxu0 %v279
    %348 = vmatpush.bf16.msra.mxu0 %v275
    %349 = vmatpush.bf16.msra.mxu0 %v271
    %350 = vmatpush.bf16.msra.mxu0 %v267
    %351 = vmatmul.bf16.gmra.mxu0 %v128
    %v352 = vpop.f32.mrf.mxu0
    %v353 = vadd.f32 %v163, %v352
    %v354 = vpop.f32.mrf.mxu0
    %355 = vdwg.mxu0
    %356 = vmatpush.bf16.msra.mxu0 %v296
    %357 = vmatpush.bf16.msra.mxu0 %v292
    %358 = vmatpush.bf16.msra.mxu0 %v288
    %359 = vmatpush.bf16.msra.mxu0 %v284
    %360 = vmatpush.bf16.msra.mxu0 %v280
    %361 = vmatpush.bf16.msra.mxu0 %v276
    %362 = vmatpush.bf16.msra.mxu0 %v272
    %363 = vmatpush.bf16.msra.mxu0 %v268
    %364 = vmatmul.bf16.gmra.mxu0 %v128
    %v365 = vpop.f32.mrf.mxu0
    %v366 = vadd.f32 %v164, %v365
    %v367 = vpop.f32.mrf.mxu0
    %368 = vdwg.mxu0
    %369 = vmatpush.bf16.msra.mxu0 %v297
    %370 = vmatpush.bf16.msra.mxu0 %v293
    %371 = vmatpush.bf16.msra.mxu0 %v289
    %372 = vmatpush.bf16.msra.mxu0 %v285
    %373 = vmatpush.bf16.msra.mxu0 %v281
    %374 = vmatpush.bf16.msra.mxu0 %v277
    %375 = vmatpush.bf16.msra.mxu0 %v273
    %376 = vmatpush.bf16.msra.mxu0 %v269
    %377 = vmatmul.bf16.gmra.mxu0 %v128
    %v378 = vpop.f32.mrf.mxu0
    %v379 = vadd.f32 %v165, %v378
    %v380 = vpop.f32.mrf.mxu0
    %381 = vdwg.mxu0
    %v382 = vmax.f32 %v340, 0.0
    %v383 = vmax.f32 %v353, 0.0
    %v384 = vmax.f32 %v366, 0.0
    %v385 = vmax.f32 %v379, 0.0
    %v386 = vpack.c.bf16 %v382, %v382
    %v387 = vpack.c.bf16 %v383, %v383
    %v388 = vpack.c.bf16 %v384, %v384
    %v389 = vpack.c.bf16 %v385, %v385
    %v390 = vld [vmem:[#allocation4] sm:$0xff]
    %v391 = vld [vmem:[#allocation4 + $0x8] sm:$0xff]
    %v392 = vld [vmem:[#allocation4 + $0x10] sm:$0xff]
    %v393 = vld [vmem:[#allocation4 + $0x18] sm:$0xff]
    %v394 = vld [vmem:[#allocation4 + $0x20] sm:$0xff]
    %v395 = vld [vmem:[#allocation4 + $0x28] sm:$0xff]
    %v396 = vld [vmem:[#allocation4 + $0x30] sm:$0xff]
    %v397 = vld [vmem:[#allocation4 + $0x38] sm:$0xff]
    %v398 = vld [vmem:[#allocation4 + $0x40] sm:$0xff]
    %v399 = vld [vmem:[#allocation4 + $0x48] sm:$0xff]
    %v400 = vld [vmem:[#allocation4 + $0x50] sm:$0xff]
    %v401 = vld [vmem:[#allocation4 + $0x58] sm:$0xff]
    %v402 = vld [vmem:[#allocation4 + $0x60] sm:$0xff]
    %v403 = vld [vmem:[#allocation4 + $0x68] sm:$0xff]
    %v404 = vld [vmem:[#allocation4 + $0x70] sm:$0xff]
    %v405 = vld [vmem:[#allocation4 + $0x78] sm:$0xff]
    %v406 = vld [vmem:[#allocation4 + $0x80] sm:$0xff]
    %v407 = vld [vmem:[#allocation4 + $0x88] sm:$0xff]
    %v408 = vld [vmem:[#allocation4 + $0x90] sm:$0xff]
    %v409 = vld [vmem:[#allocation4 + $0x98] sm:$0xff]
    %v410 = vld [vmem:[#allocation4 + $0xa0] sm:$0xff]
    %v411 = vld [vmem:[#allocation4 + $0xa8] sm:$0xff]
    %v412 = vld [vmem:[#allocation4 + $0xb0] sm:$0xff]
    %v413 = vld [vmem:[#allocation4 + $0xb8] sm:$0xff]
    %v414 = vld [vmem:[#allocation4 + $0xc0] sm:$0xff]
    %v415 = vld [vmem:[#allocation4 + $0xc8] sm:$0xff]
    %v416 = vld [vmem:[#allocation4 + $0xd0] sm:$0xff]
    %v417 = vld [vmem:[#allocation4 + $0xd8] sm:$0xff]
    %v418 = vld [vmem:[#allocation4 + $0xe0] sm:$0xff]
    %v419 = vld [vmem:[#allocation4 + $0xe8] sm:$0xff]
    %v420 = vld [vmem:[#allocation4 + $0xf0] sm:$0xff]
    %v421 = vld [vmem:[#allocation4 + $0xf8] sm:$0xff]
    %v422 = vld [vmem:[#allocation4 + $0x100] sm:$0xff]
    %v423 = vld [vmem:[#allocation4 + $0x108] sm:$0xff]
    %v424 = vld [vmem:[#allocation4 + $0x110] sm:$0xff]
    %v425 = vld [vmem:[#allocation4 + $0x118] sm:$0xff]
    %v426 = vld [vmem:[#allocation4 + $0x120] sm:$0xff]
    %v427 = vld [vmem:[#allocation4 + $0x128] sm:$0xff]
    %v428 = vld [vmem:[#allocation4 + $0x130] sm:$0xff]
    %v429 = vld [vmem:[#allocation4 + $0x138] sm:$0xff]
    %v430 = vld [vmem:[#allocation4 + $0x140] sm:$0xff]
    %v431 = vld [vmem:[#allocation4 + $0x148] sm:$0xff]
    %v432 = vld [vmem:[#allocation4 + $0x150] sm:$0xff]
    %v433 = vld [vmem:[#allocation4 + $0x158] sm:$0xff]
    %v434 = vld [vmem:[#allocation4 + $0x160] sm:$0xff]
    %v435 = vld [vmem:[#allocation4 + $0x168] sm:$0xff]
    %v436 = vld [vmem:[#allocation4 + $0x170] sm:$0xff]
    %v437 = vld [vmem:[#allocation4 + $0x178] sm:$0xff]
    %v438 = vld [vmem:[#allocation4 + $0x180] sm:$0xff]
    %v439 = vld [vmem:[#allocation4 + $0x188] sm:$0xff]
    %v440 = vld [vmem:[#allocation4 + $0x190] sm:$0xff]
    %v441 = vld [vmem:[#allocation4 + $0x198] sm:$0xff]
    %v442 = vld [vmem:[#allocation4 + $0x1a0] sm:$0xff]
    %v443 = vld [vmem:[#allocation4 + $0x1a8] sm:$0xff]
    %v444 = vld [vmem:[#allocation4 + $0x1b0] sm:$0xff]
    %v445 = vld [vmem:[#allocation4 + $0x1b8] sm:$0xff]
    %v446 = vld [vmem:[#allocation4 + $0x1c0] sm:$0xff]
    %v447 = vld [vmem:[#allocation4 + $0x1c8] sm:$0xff]
    %v448 = vld [vmem:[#allocation4 + $0x1d0] sm:$0xff]
    %v449 = vld [vmem:[#allocation4 + $0x1d8] sm:$0xff]
    %v450 = vld [vmem:[#allocation4 + $0x1e0] sm:$0xff]
    %v451 = vld [vmem:[#allocation4 + $0x1e8] sm:$0xff]
    %v452 = vld [vmem:[#allocation4 + $0x1f0] sm:$0xff]
    %v453 = vld [vmem:[#allocation4 + $0x1f8] sm:$0xff]
    %v454 = vld [vmem:[#allocation4 + $0x200] sm:$0xff]
    %v455 = vld [vmem:[#allocation4 + $0x208] sm:$0xff]
    %v456 = vld [vmem:[#allocation4 + $0x210] sm:$0xff]
    %v457 = vld [vmem:[#allocation4 + $0x218] sm:$0xff]
    %v458 = vld [vmem:[#allocation4 + $0x220] sm:$0xff]
    %v459 = vld [vmem:[#allocation4 + $0x228] sm:$0xff]
    %v460 = vld [vmem:[#allocation4 + $0x230] sm:$0xff]
    %v461 = vld [vmem:[#allocation4 + $0x238] sm:$0xff]
    %v462 = vld [vmem:[#allocation4 + $0x240] sm:$0xff]
    %v463 = vld [vmem:[#allocation4 + $0x248] sm:$0xff]
    %v464 = vld [vmem:[#allocation4 + $0x250] sm:$0xff]
    %v465 = vld [vmem:[#allocation4 + $0x258] sm:$0xff]
    %v466 = vld [vmem:[#allocation4 + $0x260] sm:$0xff]
    %v467 = vld [vmem:[#allocation4 + $0x268] sm:$0xff]
    %v468 = vld [vmem:[#allocation4 + $0x270] sm:$0xff]
    %v469 = vld [vmem:[#allocation4 + $0x278] sm:$0xff]
    %v470 = vld [vmem:[#allocation4 + $0x280] sm:$0xff]
    %v471 = vld [vmem:[#allocation4 + $0x288] sm:$0xff]
    %v472 = vld [vmem:[#allocation4 + $0x290] sm:$0xff]
    %v473 = vld [vmem:[#allocation4 + $0x298] sm:$0xff]
    %v474 = vld [vmem:[#allocation4 + $0x2a0] sm:$0xff]
    %v475 = vld [vmem:[#allocation4 + $0x2a8] sm:$0xff]
    %v476 = vld [vmem:[#allocation4 + $0x2b0] sm:$0xff]
    %v477 = vld [vmem:[#allocation4 + $0x2b8] sm:$0xff]
    %v478 = vld [vmem:[#allocation4 + $0x2c0] sm:$0xff]
    %v479 = vld [vmem:[#allocation4 + $0x2c8] sm:$0xff]
    %v480 = vld [vmem:[#allocation4 + $0x2d0] sm:$0xff]
    %v481 = vld [vmem:[#allocation4 + $0x2d8] sm:$0xff]
    %v482 = vld [vmem:[#allocation4 + $0x2e0] sm:$0xff]
    %v483 = vld [vmem:[#allocation4 + $0x2e8] sm:$0xff]
    %v484 = vld [vmem:[#allocation4 + $0x2f0] sm:$0xff]
    %v485 = vld [vmem:[#allocation4 + $0x2f8] sm:$0xff]
    %v486 = vld [vmem:[#allocation4 + $0x300] sm:$0xff]
    %v487 = vld [vmem:[#allocation4 + $0x308] sm:$0xff]
    %v488 = vld [vmem:[#allocation4 + $0x310] sm:$0xff]
    %v489 = vld [vmem:[#allocation4 + $0x318] sm:$0xff]
    %v490 = vld [vmem:[#allocation4 + $0x320] sm:$0xff]
    %v491 = vld [vmem:[#allocation4 + $0x328] sm:$0xff]
    %v492 = vld [vmem:[#allocation4 + $0x330] sm:$0xff]
    %v493 = vld [vmem:[#allocation4 + $0x338] sm:$0xff]
    %v494 = vld [vmem:[#allocation4 + $0x340] sm:$0xff]
    %v495 = vld [vmem:[#allocation4 + $0x348] sm:$0xff]
    %v496 = vld [vmem:[#allocation4 + $0x350] sm:$0xff]
    %v497 = vld [vmem:[#allocation4 + $0x358] sm:$0xff]
    %v498 = vld [vmem:[#allocation4 + $0x360] sm:$0xff]
    %v499 = vld [vmem:[#allocation4 + $0x368] sm:$0xff]
    %v500 = vld [vmem:[#allocation4 + $0x370] sm:$0xff]
    %v501 = vld [vmem:[#allocation4 + $0x378] sm:$0xff]
    %v502 = vld [vmem:[#allocation4 + $0x380] sm:$0xff]
    %v503 = vld [vmem:[#allocation4 + $0x388] sm:$0xff]
    %v504 = vld [vmem:[#allocation4 + $0x390] sm:$0xff]
    %v505 = vld [vmem:[#allocation4 + $0x398] sm:$0xff]
    %v506 = vld [vmem:[#allocation4 + $0x3a0] sm:$0xff]
    %v507 = vld [vmem:[#allocation4 + $0x3a8] sm:$0xff]
    %v508 = vld [vmem:[#allocation4 + $0x3b0] sm:$0xff]
    %v509 = vld [vmem:[#allocation4 + $0x3b8] sm:$0xff]
    %v510 = vld [vmem:[#allocation4 + $0x3c0] sm:$0xff]
    %v511 = vld [vmem:[#allocation4 + $0x3c8] sm:$0xff]
    %v512 = vld [vmem:[#allocation4 + $0x3d0] sm:$0xff]
    %v513 = vld [vmem:[#allocation4 + $0x3d8] sm:$0xff]
    %v514 = vld [vmem:[#allocation4 + $0x3e0] sm:$0xff]
    %v515 = vld [vmem:[#allocation4 + $0x3e8] sm:$0xff]
    %v516 = vld [vmem:[#allocation4 + $0x3f0] sm:$0xff]
    %v517 = vld [vmem:[#allocation4 + $0x3f8] sm:$0xff]
    %v519 = vperm.slane %v91, 0
    %v520 = vperm.slane %v91, 1
    %v521 = vperm.slane %v91, 2
    %v522 = vperm.slane %v91, 3
    %v655 = vunpack.c.l.b16 %v390
    %v656 = vunpack.c.h.b16 %v390
    %v657 = vunpack.c.l.b16 %v391
    %v658 = vunpack.c.h.b16 %v391
    %v659 = vunpack.c.l.b16 %v392
    %v660 = vunpack.c.h.b16 %v392
    %v661 = vunpack.c.l.b16 %v393
    %v662 = vunpack.c.h.b16 %v393
    %v663 = vunpack.c.l.b16 %v394
    %v664 = vunpack.c.h.b16 %v394
    %v665 = vunpack.c.l.b16 %v395
    %v666 = vunpack.c.h.b16 %v395
    %v667 = vunpack.c.l.b16 %v396
    %v668 = vunpack.c.h.b16 %v396
    %v669 = vunpack.c.l.b16 %v397
    %v670 = vunpack.c.h.b16 %v397
    %v671 = vunpack.c.l.b16 %v398
    %v672 = vunpack.c.h.b16 %v398
    %v673 = vunpack.c.l.b16 %v399
    %v674 = vunpack.c.h.b16 %v399
    %v675 = vunpack.c.l.b16 %v400
    %v676 = vunpack.c.h.b16 %v400
    %v677 = vunpack.c.l.b16 %v401
    %v678 = vunpack.c.h.b16 %v401
    %v679 = vunpack.c.l.b16 %v402
    %v680 = vunpack.c.h.b16 %v402
    %v681 = vunpack.c.l.b16 %v403
    %v682 = vunpack.c.h.b16 %v403
    %v683 = vunpack.c.l.b16 %v404
    %v684 = vunpack.c.h.b16 %v404
    %v685 = vunpack.c.l.b16 %v405
    %v686 = vunpack.c.h.b16 %v405
    %v687 = vunpack.c.l.b16 %v406
    %v688 = vunpack.c.h.b16 %v406
    %v689 = vunpack.c.l.b16 %v407
    %v690 = vunpack.c.h.b16 %v407
    %v691 = vunpack.c.l.b16 %v408
    %v692 = vunpack.c.h.b16 %v408
    %v693 = vunpack.c.l.b16 %v409
    %v694 = vunpack.c.h.b16 %v409
    %v695 = vunpack.c.l.b16 %v410
    %v696 = vunpack.c.h.b16 %v410
    %v697 = vunpack.c.l.b16 %v411
    %v698 = vunpack.c.h.b16 %v411
    %v699 = vunpack.c.l.b16 %v412
    %v700 = vunpack.c.h.b16 %v412
    %v701 = vunpack.c.l.b16 %v413
    %v702 = vunpack.c.h.b16 %v413
    %v703 = vunpack.c.l.b16 %v414
    %v704 = vunpack.c.h.b16 %v414
    %v705 = vunpack.c.l.b16 %v415
    %v706 = vunpack.c.h.b16 %v415
    %v707 = vunpack.c.l.b16 %v416
    %v708 = vunpack.c.h.b16 %v416
    %v709 = vunpack.c.l.b16 %v417
    %v710 = vunpack.c.h.b16 %v417
    %v711 = vunpack.c.l.b16 %v418
    %v712 = vunpack.c.h.b16 %v418
    %v713 = vunpack.c.l.b16 %v419
    %v714 = vunpack.c.h.b16 %v419
    %v715 = vunpack.c.l.b16 %v420
    %v716 = vunpack.c.h.b16 %v420
    %v717 = vunpack.c.l.b16 %v421
    %v718 = vunpack.c.h.b16 %v421
    %v719 = vunpack.c.l.b16 %v422
    %v720 = vunpack.c.h.b16 %v422
    %v721 = vunpack.c.l.b16 %v423
    %v722 = vunpack.c.h.b16 %v423
    %v723 = vunpack.c.l.b16 %v424
    %v724 = vunpack.c.h.b16 %v424
    %v725 = vunpack.c.l.b16 %v425
    %v726 = vunpack.c.h.b16 %v425
    %v727 = vunpack.c.l.b16 %v426
    %v728 = vunpack.c.h.b16 %v426
    %v729 = vunpack.c.l.b16 %v427
    %v730 = vunpack.c.h.b16 %v427
    %v731 = vunpack.c.l.b16 %v428
    %v732 = vunpack.c.h.b16 %v428
    %v733 = vunpack.c.l.b16 %v429
    %v734 = vunpack.c.h.b16 %v429
    %v735 = vunpack.c.l.b16 %v430
    %v736 = vunpack.c.h.b16 %v430
    %v737 = vunpack.c.l.b16 %v431
    %v738 = vunpack.c.h.b16 %v431
    %v739 = vunpack.c.l.b16 %v432
    %v740 = vunpack.c.h.b16 %v432
    %v741 = vunpack.c.l.b16 %v433
    %v742 = vunpack.c.h.b16 %v433
    %v743 = vunpack.c.l.b16 %v434
    %v744 = vunpack.c.h.b16 %v434
    %v745 = vunpack.c.l.b16 %v435
    %v746 = vunpack.c.h.b16 %v435
    %v747 = vunpack.c.l.b16 %v436
    %v748 = vunpack.c.h.b16 %v436
    %v749 = vunpack.c.l.b16 %v437
    %v750 = vunpack.c.h.b16 %v437
    %v751 = vunpack.c.l.b16 %v438
    %v752 = vunpack.c.h.b16 %v438
    %v753 = vunpack.c.l.b16 %v439
    %v754 = vunpack.c.h.b16 %v439
    %v755 = vunpack.c.l.b16 %v440
    %v756 = vunpack.c.h.b16 %v440
    %v757 = vunpack.c.l.b16 %v441
    %v758 = vunpack.c.h.b16 %v441
    %v759 = vunpack.c.l.b16 %v442
    %v760 = vunpack.c.h.b16 %v442
    %v761 = vunpack.c.l.b16 %v443
    %v762 = vunpack.c.h.b16 %v443
    %v763 = vunpack.c.l.b16 %v444
    %v764 = vunpack.c.h.b16 %v444
    %v765 = vunpack.c.l.b16 %v445
    %v766 = vunpack.c.h.b16 %v445
    %v767 = vunpack.c.l.b16 %v446
    %v768 = vunpack.c.h.b16 %v446
    %v769 = vunpack.c.l.b16 %v447
    %v770 = vunpack.c.h.b16 %v447
    %v771 = vunpack.c.l.b16 %v448
    %v772 = vunpack.c.h.b16 %v448
    %v773 = vunpack.c.l.b16 %v449
    %v774 = vunpack.c.h.b16 %v449
    %v775 = vunpack.c.l.b16 %v450
    %v776 = vunpack.c.h.b16 %v450
    %v777 = vunpack.c.l.b16 %v451
    %v778 = vunpack.c.h.b16 %v451
    %v779 = vunpack.c.l.b16 %v452
    %v780 = vunpack.c.h.b16 %v452
    %v781 = vunpack.c.l.b16 %v453
    %v782 = vunpack.c.h.b16 %v453
    %v783 = vunpack.c.l.b16 %v454
    %v784 = vunpack.c.h.b16 %v454
    %v785 = vunpack.c.l.b16 %v455
    %v786 = vunpack.c.h.b16 %v455
    %v787 = vunpack.c.l.b16 %v456
    %v788 = vunpack.c.h.b16 %v456
    %v789 = vunpack.c.l.b16 %v457
    %v790 = vunpack.c.h.b16 %v457
    %v791 = vunpack.c.l.b16 %v458
    %v792 = vunpack.c.h.b16 %v458
    %v793 = vunpack.c.l.b16 %v459
    %v794 = vunpack.c.h.b16 %v459
    %v795 = vunpack.c.l.b16 %v460
    %v796 = vunpack.c.h.b16 %v460
    %v797 = vunpack.c.l.b16 %v461
    %v798 = vunpack.c.h.b16 %v461
    %v799 = vunpack.c.l.b16 %v462
    %v800 = vunpack.c.h.b16 %v462
    %v801 = vunpack.c.l.b16 %v463
    %v802 = vunpack.c.h.b16 %v463
    %v803 = vunpack.c.l.b16 %v464
    %v804 = vunpack.c.h.b16 %v464
    %v805 = vunpack.c.l.b16 %v465
    %v806 = vunpack.c.h.b16 %v465
    %v807 = vunpack.c.l.b16 %v466
    %v808 = vunpack.c.h.b16 %v466
    %v809 = vunpack.c.l.b16 %v467
    %v810 = vunpack.c.h.b16 %v467
    %v811 = vunpack.c.l.b16 %v468
    %v812 = vunpack.c.h.b16 %v468
    %v813 = vunpack.c.l.b16 %v469
    %v814 = vunpack.c.h.b16 %v469
    %v815 = vunpack.c.l.b16 %v470
    %v816 = vunpack.c.h.b16 %v470
    %v817 = vunpack.c.l.b16 %v471
    %v818 = vunpack.c.h.b16 %v471
    %v819 = vunpack.c.l.b16 %v472
    %v820 = vunpack.c.h.b16 %v472
    %v821 = vunpack.c.l.b16 %v473
    %v822 = vunpack.c.h.b16 %v473
    %v823 = vunpack.c.l.b16 %v474
    %v824 = vunpack.c.h.b16 %v474
    %v825 = vunpack.c.l.b16 %v475
    %v826 = vunpack.c.h.b16 %v475
    %v827 = vunpack.c.l.b16 %v476
    %v828 = vunpack.c.h.b16 %v476
    %v829 = vunpack.c.l.b16 %v477
    %v830 = vunpack.c.h.b16 %v477
    %v831 = vunpack.c.l.b16 %v478
    %v832 = vunpack.c.h.b16 %v478
    %v833 = vunpack.c.l.b16 %v479
    %v834 = vunpack.c.h.b16 %v479
    %v835 = vunpack.c.l.b16 %v480
    %v836 = vunpack.c.h.b16 %v480
    %v837 = vunpack.c.l.b16 %v481
    %v838 = vunpack.c.h.b16 %v481
    %v839 = vunpack.c.l.b16 %v482
    %v840 = vunpack.c.h.b16 %v482
    %v841 = vunpack.c.l.b16 %v483
    %v842 = vunpack.c.h.b16 %v483
    %v843 = vunpack.c.l.b16 %v484
    %v844 = vunpack.c.h.b16 %v484
    %v845 = vunpack.c.l.b16 %v485
    %v846 = vunpack.c.h.b16 %v485
    %v847 = vunpack.c.l.b16 %v486
    %v848 = vunpack.c.h.b16 %v486
    %v849 = vunpack.c.l.b16 %v487
    %v850 = vunpack.c.h.b16 %v487
    %v851 = vunpack.c.l.b16 %v488
    %v852 = vunpack.c.h.b16 %v488
    %v853 = vunpack.c.l.b16 %v489
    %v854 = vunpack.c.h.b16 %v489
    %v855 = vunpack.c.l.b16 %v490
    %v856 = vunpack.c.h.b16 %v490
    %v857 = vunpack.c.l.b16 %v491
    %v858 = vunpack.c.h.b16 %v491
    %v859 = vunpack.c.l.b16 %v492
    %v860 = vunpack.c.h.b16 %v492
    %v861 = vunpack.c.l.b16 %v493
    %v862 = vunpack.c.h.b16 %v493
    %v863 = vunpack.c.l.b16 %v494
    %v864 = vunpack.c.h.b16 %v494
    %v865 = vunpack.c.l.b16 %v495
    %v866 = vunpack.c.h.b16 %v495
    %v867 = vunpack.c.l.b16 %v496
    %v868 = vunpack.c.h.b16 %v496
    %v869 = vunpack.c.l.b16 %v497
    %v870 = vunpack.c.h.b16 %v497
    %v871 = vunpack.c.l.b16 %v498
    %v872 = vunpack.c.h.b16 %v498
    %v873 = vunpack.c.l.b16 %v499
    %v874 = vunpack.c.h.b16 %v499
    %v875 = vunpack.c.l.b16 %v500
    %v876 = vunpack.c.h.b16 %v500
    %v877 = vunpack.c.l.b16 %v501
    %v878 = vunpack.c.h.b16 %v501
    %v879 = vunpack.c.l.b16 %v502
    %v880 = vunpack.c.h.b16 %v502
    %v881 = vunpack.c.l.b16 %v503
    %v882 = vunpack.c.h.b16 %v503
    %v883 = vunpack.c.l.b16 %v504
    %v884 = vunpack.c.h.b16 %v504
    %v885 = vunpack.c.l.b16 %v505
    %v886 = vunpack.c.h.b16 %v505
    %v887 = vunpack.c.l.b16 %v506
    %v888 = vunpack.c.h.b16 %v506
    %v889 = vunpack.c.l.b16 %v507
    %v890 = vunpack.c.h.b16 %v507
    %v891 = vunpack.c.l.b16 %v508
    %v892 = vunpack.c.h.b16 %v508
    %v893 = vunpack.c.l.b16 %v509
    %v894 = vunpack.c.h.b16 %v509
    %v895 = vunpack.c.l.b16 %v510
    %v896 = vunpack.c.h.b16 %v510
    %v897 = vunpack.c.l.b16 %v511
    %v898 = vunpack.c.h.b16 %v511
    %v899 = vunpack.c.l.b16 %v512
    %v900 = vunpack.c.h.b16 %v512
    %v901 = vunpack.c.l.b16 %v513
    %v902 = vunpack.c.h.b16 %v513
    %v903 = vunpack.c.l.b16 %v514
    %v904 = vunpack.c.h.b16 %v514
    %v905 = vunpack.c.l.b16 %v515
    %v906 = vunpack.c.h.b16 %v515
    %v907 = vunpack.c.l.b16 %v516
    %v908 = vunpack.c.h.b16 %v516
    %v909 = vunpack.c.l.b16 %v517
    %v910 = vunpack.c.h.b16 %v517
    %v911 = vpack.c.b16 %v659, %v655
    %v912 = vpack.c.b16 %v660, %v656
    %v913 = vpack.c.b16 %v661, %v657
    %v914 = vpack.c.b16 %v662, %v658
    %v915 = vpack.c.b16 %v667, %v663
    %v916 = vpack.c.b16 %v668, %v664
    %v917 = vpack.c.b16 %v669, %v665
    %v918 = vpack.c.b16 %v670, %v666
    %v919 = vpack.c.b16 %v675, %v671
    %v920 = vpack.c.b16 %v676, %v672
    %v921 = vpack.c.b16 %v677, %v673
    %v922 = vpack.c.b16 %v678, %v674
    %v923 = vpack.c.b16 %v683, %v679
    %v924 = vpack.c.b16 %v684, %v680
    %v925 = vpack.c.b16 %v685, %v681
    %v926 = vpack.c.b16 %v686, %v682
    %v927 = vpack.c.b16 %v691, %v687
    %v928 = vpack.c.b16 %v692, %v688
    %v929 = vpack.c.b16 %v693, %v689
    %v930 = vpack.c.b16 %v694, %v690
    %v931 = vpack.c.b16 %v699, %v695
    %v932 = vpack.c.b16 %v700, %v696
    %v933 = vpack.c.b16 %v701, %v697
    %v934 = vpack.c.b16 %v702, %v698
    %v935 = vpack.c.b16 %v707, %v703
    %v936 = vpack.c.b16 %v708, %v704
    %v937 = vpack.c.b16 %v709, %v705
    %v938 = vpack.c.b16 %v710, %v706
    %v939 = vpack.c.b16 %v715, %v711
    %v940 = vpack.c.b16 %v716, %v712
    %v941 = vpack.c.b16 %v717, %v713
    %v942 = vpack.c.b16 %v718, %v714
    %v943 = vpack.c.b16 %v723, %v719
    %v944 = vpack.c.b16 %v724, %v720
    %v945 = vpack.c.b16 %v725, %v721
    %v946 = vpack.c.b16 %v726, %v722
    %v947 = vpack.c.b16 %v731, %v727
    %v948 = vpack.c.b16 %v732, %v728
    %v949 = vpack.c.b16 %v733, %v729
    %v950 = vpack.c.b16 %v734, %v730
    %v951 = vpack.c.b16 %v739, %v735
    %v952 = vpack.c.b16 %v740, %v736
    %v953 = vpack.c.b16 %v741, %v737
    %v954 = vpack.c.b16 %v742, %v738
    %v955 = vpack.c.b16 %v747, %v743
    %v956 = vpack.c.b16 %v748, %v744
    %v957 = vpack.c.b16 %v749, %v745
    %v958 = vpack.c.b16 %v750, %v746
    %v959 = vpack.c.b16 %v755, %v751
    %v960 = vpack.c.b16 %v756, %v752
    %v961 = vpack.c.b16 %v757, %v753
    %v962 = vpack.c.b16 %v758, %v754
    %v963 = vpack.c.b16 %v763, %v759
    %v964 = vpack.c.b16 %v764, %v760
    %v965 = vpack.c.b16 %v765, %v761
    %v966 = vpack.c.b16 %v766, %v762
    %v967 = vpack.c.b16 %v771, %v767
    %v968 = vpack.c.b16 %v772, %v768
    %v969 = vpack.c.b16 %v773, %v769
    %v970 = vpack.c.b16 %v774, %v770
    %v971 = vpack.c.b16 %v779, %v775
    %v972 = vpack.c.b16 %v780, %v776
    %v973 = vpack.c.b16 %v781, %v777
    %v974 = vpack.c.b16 %v782, %v778
    %v975 = vpack.c.b16 %v787, %v783
    %v976 = vpack.c.b16 %v788, %v784
    %v977 = vpack.c.b16 %v789, %v785
    %v978 = vpack.c.b16 %v790, %v786
    %v979 = vpack.c.b16 %v795, %v791
    %v980 = vpack.c.b16 %v796, %v792
    %v981 = vpack.c.b16 %v797, %v793
    %v982 = vpack.c.b16 %v798, %v794
    %v983 = vpack.c.b16 %v803, %v799
    %v984 = vpack.c.b16 %v804, %v800
    %v985 = vpack.c.b16 %v805, %v801
    %v986 = vpack.c.b16 %v806, %v802
    %v987 = vpack.c.b16 %v811, %v807
    %v988 = vpack.c.b16 %v812, %v808
    %v989 = vpack.c.b16 %v813, %v809
    %v990 = vpack.c.b16 %v814, %v810
    %v991 = vpack.c.b16 %v819, %v815
    %v992 = vpack.c.b16 %v820, %v816
    %v993 = vpack.c.b16 %v821, %v817
    %v994 = vpack.c.b16 %v822, %v818
    %v995 = vpack.c.b16 %v827, %v823
    %v996 = vpack.c.b16 %v828, %v824
    %v997 = vpack.c.b16 %v829, %v825
    %v998 = vpack.c.b16 %v830, %v826
    %v999 = vpack.c.b16 %v835, %v831
    %v1000 = vpack.c.b16 %v836, %v832
    %v1001 = vpack.c.b16 %v837, %v833
    %v1002 = vpack.c.b16 %v838, %v834
    %v1003 = vpack.c.b16 %v843, %v839
    %v1004 = vpack.c.b16 %v844, %v840
    %v1005 = vpack.c.b16 %v845, %v841
    %v1006 = vpack.c.b16 %v846, %v842
    %v1007 = vpack.c.b16 %v851, %v847
    %v1008 = vpack.c.b16 %v852, %v848
    %v1009 = vpack.c.b16 %v853, %v849
    %v1010 = vpack.c.b16 %v854, %v850
    %v1011 = vpack.c.b16 %v859, %v855
    %v1012 = vpack.c.b16 %v860, %v856
    %v1013 = vpack.c.b16 %v861, %v857
    %v1014 = vpack.c.b16 %v862, %v858
    %v1015 = vpack.c.b16 %v867, %v863
    %v1016 = vpack.c.b16 %v868, %v864
    %v1017 = vpack.c.b16 %v869, %v865
    %v1018 = vpack.c.b16 %v870, %v866
    %v1019 = vpack.c.b16 %v875, %v871
    %v1020 = vpack.c.b16 %v876, %v872
    %v1021 = vpack.c.b16 %v877, %v873
    %v1022 = vpack.c.b16 %v878, %v874
    %v1023 = vpack.c.b16 %v883, %v879
    %v1024 = vpack.c.b16 %v884, %v880
    %v1025 = vpack.c.b16 %v885, %v881
    %v1026 = vpack.c.b16 %v886, %v882
    %v1027 = vpack.c.b16 %v891, %v887
    %v1028 = vpack.c.b16 %v892, %v888
    %v1029 = vpack.c.b16 %v893, %v889
    %v1030 = vpack.c.b16 %v894, %v890
    %v1031 = vpack.c.b16 %v899, %v895
    %v1032 = vpack.c.b16 %v900, %v896
    %v1033 = vpack.c.b16 %v901, %v897
    %v1034 = vpack.c.b16 %v902, %v898
    %v1035 = vpack.c.b16 %v907, %v903
    %v1036 = vpack.c.b16 %v908, %v904
    %v1037 = vpack.c.b16 %v909, %v905
    %v1038 = vpack.c.b16 %v910, %v906
    %1167 = vmatpush.bf16.msra.mxu0 %v939
    %1168 = vmatpush.bf16.msra.mxu0 %v935
    %1169 = vmatpush.bf16.msra.mxu0 %v931
    %1170 = vmatpush.bf16.msra.mxu0 %v927
    %1171 = vmatpush.bf16.msra.mxu0 %v923
    %1172 = vmatpush.bf16.msra.mxu0 %v919
    %1173 = vmatpush.bf16.msra.mxu0 %v915
    %1174 = vmatpush.bf16.msra.mxu0 %v911
    %1175 = vmatmul.bf16.gmra.mxu0 %v386
    %v1176 = vpop.f32.mrf.mxu0
    %v1177 = vadd.f32 %v519, %v1176
    %v1178 = vpop.f32.mrf.mxu0
    %1179 = vdwg.mxu0
    %1180 = vmatpush.bf16.msra.mxu0 %v971
    %1181 = vmatpush.bf16.msra.mxu0 %v967
    %1182 = vmatpush.bf16.msra.mxu0 %v963
    %1183 = vmatpush.bf16.msra.mxu0 %v959
    %1184 = vmatpush.bf16.msra.mxu0 %v955
    %1185 = vmatpush.bf16.msra.mxu0 %v951
    %1186 = vmatpush.bf16.msra.mxu0 %v947
    %1187 = vmatpush.bf16.msra.mxu0 %v943
    %1188 = vmatmul.bf16.gmra.mxu0 %v387
    %v1189 = vpop.f32.mrf.mxu0
    %v1190 = vadd.f32 %v1177, %v1189
    %v1191 = vpop.f32.mrf.mxu0
    %1192 = vdwg.mxu0
    %1193 = vmatpush.bf16.msra.mxu0 %v1003
    %1194 = vmatpush.bf16.msra.mxu0 %v999
    %1195 = vmatpush.bf16.msra.mxu0 %v995
    %1196 = vmatpush.bf16.msra.mxu0 %v991
    %1197 = vmatpush.bf16.msra.mxu0 %v987
    %1198 = vmatpush.bf16.msra.mxu0 %v983
    %1199 = vmatpush.bf16.msra.mxu0 %v979
    %1200 = vmatpush.bf16.msra.mxu0 %v975
    %1201 = vmatmul.bf16.gmra.mxu0 %v388
    %v1202 = vpop.f32.mrf.mxu0
    %v1203 = vadd.f32 %v1190, %v1202
    %v1204 = vpop.f32.mrf.mxu0
    %1205 = vdwg.mxu0
    %1206 = vmatpush.bf16.msra.mxu0 %v1035
    %1207 = vmatpush.bf16.msra.mxu0 %v1031
    %1208 = vmatpush.bf16.msra.mxu0 %v1027
    %1209 = vmatpush.bf16.msra.mxu0 %v1023
    %1210 = vmatpush.bf16.msra.mxu0 %v1019
    %1211 = vmatpush.bf16.msra.mxu0 %v1015
    %1212 = vmatpush.bf16.msra.mxu0 %v1011
    %1213 = vmatpush.bf16.msra.mxu0 %v1007
    %1214 = vmatmul.bf16.gmra.mxu0 %v389
    %v1215 = vpop.f32.mrf.mxu0
    %v1216 = vadd.f32 %v1203, %v1215
    %v1217 = vpop.f32.mrf.mxu0
    %1218 = vdwg.mxu0
    %1219 = vmatpush.bf16.msra.mxu0 %v940
    %1220 = vmatpush.bf16.msra.mxu0 %v936
    %1221 = vmatpush.bf16.msra.mxu0 %v932
    %1222 = vmatpush.bf16.msra.mxu0 %v928
    %1223 = vmatpush.bf16.msra.mxu0 %v924
    %1224 = vmatpush.bf16.msra.mxu0 %v920
    %1225 = vmatpush.bf16.msra.mxu0 %v916
    %1226 = vmatpush.bf16.msra.mxu0 %v912
    %1227 = vmatmul.bf16.gmra.mxu0 %v386
    %v1228 = vpop.f32.mrf.mxu0
    %v1229 = vadd.f32 %v520, %v1228
    %v1230 = vpop.f32.mrf.mxu0
    %1231 = vdwg.mxu0
    %1232 = vmatpush.bf16.msra.mxu0 %v972
    %1233 = vmatpush.bf16.msra.mxu0 %v968
    %1234 = vmatpush.bf16.msra.mxu0 %v964
    %1235 = vmatpush.bf16.msra.mxu0 %v960
    %1236 = vmatpush.bf16.msra.mxu0 %v956
    %1237 = vmatpush.bf16.msra.mxu0 %v952
    %1238 = vmatpush.bf16.msra.mxu0 %v948
    %1239 = vmatpush.bf16.msra.mxu0 %v944
    %1240 = vmatmul.bf16.gmra.mxu0 %v387
    %v1241 = vpop.f32.mrf.mxu0
    %v1242 = vadd.f32 %v1229, %v1241
    %v1243 = vpop.f32.mrf.mxu0
    %1244 = vdwg.mxu0
    %1245 = vmatpush.bf16.msra.mxu0 %v1004
    %1246 = vmatpush.bf16.msra.mxu0 %v1000
    %1247 = vmatpush.bf16.msra.mxu0 %v996
    %1248 = vmatpush.bf16.msra.mxu0 %v992
    %1249 = vmatpush.bf16.msra.mxu0 %v988
    %1250 = vmatpush.bf16.msra.mxu0 %v984
    %1251 = vmatpush.bf16.msra.mxu0 %v980
    %1252 = vmatpush.bf16.msra.mxu0 %v976
    %1253 = vmatmul.bf16.gmra.mxu0 %v388
    %v1254 = vpop.f32.mrf.mxu0
    %v1255 = vadd.f32 %v1242, %v1254
    %v1256 = vpop.f32.mrf.mxu0
    %1257 = vdwg.mxu0
    %1258 = vmatpush.bf16.msra.mxu0 %v1036
    %1259 = vmatpush.bf16.msra.mxu0 %v1032
    %1260 = vmatpush.bf16.msra.mxu0 %v1028
    %1261 = vmatpush.bf16.msra.mxu0 %v1024
    %1262 = vmatpush.bf16.msra.mxu0 %v1020
    %1263 = vmatpush.bf16.msra.mxu0 %v1016
    %1264 = vmatpush.bf16.msra.mxu0 %v1012
    %1265 = vmatpush.bf16.msra.mxu0 %v1008
    %1266 = vmatmul.bf16.gmra.mxu0 %v389
    %v1267 = vpop.f32.mrf.mxu0
    %v1268 = vadd.f32 %v1255, %v1267
    %v1269 = vpop.f32.mrf.mxu0
    %1270 = vdwg.mxu0
    %1271 = vmatpush.bf16.msra.mxu0 %v941
    %1272 = vmatpush.bf16.msra.mxu0 %v937
    %1273 = vmatpush.bf16.msra.mxu0 %v933
    %1274 = vmatpush.bf16.msra.mxu0 %v929
    %1275 = vmatpush.bf16.msra.mxu0 %v925
    %1276 = vmatpush.bf16.msra.mxu0 %v921
    %1277 = vmatpush.bf16.msra.mxu0 %v917
    %1278 = vmatpush.bf16.msra.mxu0 %v913
    %1279 = vmatmul.bf16.gmra.mxu0 %v386
    %v1280 = vpop.f32.mrf.mxu0
    %v1281 = vadd.f32 %v521, %v1280
    %v1282 = vpop.f32.mrf.mxu0
    %1283 = vdwg.mxu0
    %1284 = vmatpush.bf16.msra.mxu0 %v973
    %1285 = vmatpush.bf16.msra.mxu0 %v969
    %1286 = vmatpush.bf16.msra.mxu0 %v965
    %1287 = vmatpush.bf16.msra.mxu0 %v961
    %1288 = vmatpush.bf16.msra.mxu0 %v957
    %1289 = vmatpush.bf16.msra.mxu0 %v953
    %1290 = vmatpush.bf16.msra.mxu0 %v949
    %1291 = vmatpush.bf16.msra.mxu0 %v945
    %1292 = vmatmul.bf16.gmra.mxu0 %v387
    %v1293 = vpop.f32.mrf.mxu0
    %v1294 = vadd.f32 %v1281, %v1293
    %v1295 = vpop.f32.mrf.mxu0
    %1296 = vdwg.mxu0
    %1297 = vmatpush.bf16.msra.mxu0 %v1005
    %1298 = vmatpush.bf16.msra.mxu0 %v1001
    %1299 = vmatpush.bf16.msra.mxu0 %v997
    %1300 = vmatpush.bf16.msra.mxu0 %v993
    %1301 = vmatpush.bf16.msra.mxu0 %v989
    %1302 = vmatpush.bf16.msra.mxu0 %v985
    %1303 = vmatpush.bf16.msra.mxu0 %v981
    %1304 = vmatpush.bf16.msra.mxu0 %v977
    %1305 = vmatmul.bf16.gmra.mxu0 %v388
    %v1306 = vpop.f32.mrf.mxu0
    %v1307 = vadd.f32 %v1294, %v1306
    %v1308 = vpop.f32.mrf.mxu0
    %1309 = vdwg.mxu0
    %1310 = vmatpush.bf16.msra.mxu0 %v1037
    %1311 = vmatpush.bf16.msra.mxu0 %v1033
    %1312 = vmatpush.bf16.msra.mxu0 %v1029
    %1313 = vmatpush.bf16.msra.mxu0 %v1025
    %1314 = vmatpush.bf16.msra.mxu0 %v1021
    %1315 = vmatpush.bf16.msra.mxu0 %v1017
    %1316 = vmatpush.bf16.msra.mxu0 %v1013
    %1317 = vmatpush.bf16.msra.mxu0 %v1009
    %1318 = vmatmul.bf16.gmra.mxu0 %v389
    %v1319 = vpop.f32.mrf.mxu0
    %v1320 = vadd.f32 %v1307, %v1319
    %v1321 = vpop.f32.mrf.mxu0
    %1322 = vdwg.mxu0
    %1323 = vmatpush.bf16.msra.mxu0 %v942
    %1324 = vmatpush.bf16.msra.mxu0 %v938
    %1325 = vmatpush.bf16.msra.mxu0 %v934
    %1326 = vmatpush.bf16.msra.mxu0 %v930
    %1327 = vmatpush.bf16.msra.mxu0 %v926
    %1328 = vmatpush.bf16.msra.mxu0 %v922
    %1329 = vmatpush.bf16.msra.mxu0 %v918
    %1330 = vmatpush.bf16.msra.mxu0 %v914
    %1331 = vmatmul.bf16.gmra.mxu0 %v386
    %v1332 = vpop.f32.mrf.mxu0
    %v1333 = vadd.f32 %v522, %v1332
    %v1334 = vpop.f32.mrf.mxu0
    %1335 = vdwg.mxu0
    %1336 = vmatpush.bf16.msra.mxu0 %v974
    %1337 = vmatpush.bf16.msra.mxu0 %v970
    %1338 = vmatpush.bf16.msra.mxu0 %v966
    %1339 = vmatpush.bf16.msra.mxu0 %v962
    %1340 = vmatpush.bf16.msra.mxu0 %v958
    %1341 = vmatpush.bf16.msra.mxu0 %v954
    %1342 = vmatpush.bf16.msra.mxu0 %v950
    %1343 = vmatpush.bf16.msra.mxu0 %v946
    %1344 = vmatmul.bf16.gmra.mxu0 %v387
    %v1345 = vpop.f32.mrf.mxu0
    %v1346 = vadd.f32 %v1333, %v1345
    %v1347 = vpop.f32.mrf.mxu0
    %1348 = vdwg.mxu0
    %1349 = vmatpush.bf16.msra.mxu0 %v1006
    %1350 = vmatpush.bf16.msra.mxu0 %v1002
    %1351 = vmatpush.bf16.msra.mxu0 %v998
    %1352 = vmatpush.bf16.msra.mxu0 %v994
    %1353 = vmatpush.bf16.msra.mxu0 %v990
    %1354 = vmatpush.bf16.msra.mxu0 %v986
    %1355 = vmatpush.bf16.msra.mxu0 %v982
    %1356 = vmatpush.bf16.msra.mxu0 %v978
    %1357 = vmatmul.bf16.gmra.mxu0 %v388
    %v1358 = vpop.f32.mrf.mxu0
    %v1359 = vadd.f32 %v1346, %v1358
    %v1360 = vpop.f32.mrf.mxu0
    %1361 = vdwg.mxu0
    %1362 = vmatpush.bf16.msra.mxu0 %v1038
    %1363 = vmatpush.bf16.msra.mxu0 %v1034
    %1364 = vmatpush.bf16.msra.mxu0 %v1030
    %1365 = vmatpush.bf16.msra.mxu0 %v1026
    %1366 = vmatpush.bf16.msra.mxu0 %v1022
    %1367 = vmatpush.bf16.msra.mxu0 %v1018
    %1368 = vmatpush.bf16.msra.mxu0 %v1014
    %1369 = vmatpush.bf16.msra.mxu0 %v1010
    %1370 = vmatmul.bf16.gmra.mxu0 %v389
    %v1371 = vpop.f32.mrf.mxu0
    %v1372 = vadd.f32 %v1359, %v1371
    %v1373 = vpop.f32.mrf.mxu0
    %1374 = vdwg.mxu0
    %v1375 = vmax.f32 %v1216, 0.0
    %v1376 = vmax.f32 %v1268, 0.0
    %v1377 = vmax.f32 %v1320, 0.0
    %v1378 = vmax.f32 %v1372, 0.0
    %v1379 = vpack.c.bf16 %v1375, %v1375
    %v1380 = vpack.c.bf16 %v1376, %v1376
    %v1381 = vpack.c.bf16 %v1377, %v1377
    %v1382 = vpack.c.bf16 %v1378, %v1378
    %v1383 = vld [vmem:[#allocation6] sm:$0xf]
    %v1384 = vld [vmem:[#allocation6 + $0x4] sm:$0xf]
    %v1385 = vld [vmem:[#allocation6 + $0x8] sm:$0xf]
    %v1386 = vld [vmem:[#allocation6 + $0xc] sm:$0xf]
    %v1387 = vld [vmem:[#allocation6 + $0x10] sm:$0xf]
    %v1388 = vld [vmem:[#allocation6 + $0x14] sm:$0xf]
    %v1389 = vld [vmem:[#allocation6 + $0x18] sm:$0xf]
    %v1390 = vld [vmem:[#allocation6 + $0x1c] sm:$0xf]
    %v1391 = vld [vmem:[#allocation6 + $0x20] sm:$0xf]
    %v1392 = vld [vmem:[#allocation6 + $0x24] sm:$0xf]
    %v1393 = vld [vmem:[#allocation6 + $0x28] sm:$0xf]
    %v1394 = vld [vmem:[#allocation6 + $0x2c] sm:$0xf]
    %v1395 = vld [vmem:[#allocation6 + $0x30] sm:$0xf]
    %v1396 = vld [vmem:[#allocation6 + $0x34] sm:$0xf]
    %v1397 = vld [vmem:[#allocation6 + $0x38] sm:$0xf]
    %v1398 = vld [vmem:[#allocation6 + $0x3c] sm:$0xf]
    %v1399 = vld [vmem:[#allocation6 + $0x40] sm:$0xf]
    %v1400 = vld [vmem:[#allocation6 + $0x44] sm:$0xf]
    %v1401 = vld [vmem:[#allocation6 + $0x48] sm:$0xf]
    %v1402 = vld [vmem:[#allocation6 + $0x4c] sm:$0xf]
    %v1403 = vld [vmem:[#allocation6 + $0x50] sm:$0xf]
    %v1404 = vld [vmem:[#allocation6 + $0x54] sm:$0xf]
    %v1405 = vld [vmem:[#allocation6 + $0x58] sm:$0xf]
    %v1406 = vld [vmem:[#allocation6 + $0x5c] sm:$0xf]
    %v1407 = vld [vmem:[#allocation6 + $0x60] sm:$0xf]
    %v1408 = vld [vmem:[#allocation6 + $0x64] sm:$0xf]
    %v1409 = vld [vmem:[#allocation6 + $0x68] sm:$0xf]
    %v1410 = vld [vmem:[#allocation6 + $0x6c] sm:$0xf]
    %v1411 = vld [vmem:[#allocation6 + $0x70] sm:$0xf]
    %v1412 = vld [vmem:[#allocation6 + $0x74] sm:$0xf]
    %v1413 = vld [vmem:[#allocation6 + $0x78] sm:$0xf]
    %v1414 = vld [vmem:[#allocation6 + $0x7c] sm:$0xf]
    %v1415 = vld [vmem:[#allocation6 + $0x80] sm:$0xf]
    %v1416 = vld [vmem:[#allocation6 + $0x84] sm:$0xf]
    %v1417 = vld [vmem:[#allocation6 + $0x88] sm:$0xf]
    %v1418 = vld [vmem:[#allocation6 + $0x8c] sm:$0xf]
    %v1419 = vld [vmem:[#allocation6 + $0x90] sm:$0xf]
    %v1420 = vld [vmem:[#allocation6 + $0x94] sm:$0xf]
    %v1421 = vld [vmem:[#allocation6 + $0x98] sm:$0xf]
    %v1422 = vld [vmem:[#allocation6 + $0x9c] sm:$0xf]
    %v1423 = vld [vmem:[#allocation6 + $0xa0] sm:$0xf]
    %v1424 = vld [vmem:[#allocation6 + $0xa4] sm:$0xf]
    %v1425 = vld [vmem:[#allocation6 + $0xa8] sm:$0xf]
    %v1426 = vld [vmem:[#allocation6 + $0xac] sm:$0xf]
    %v1427 = vld [vmem:[#allocation6 + $0xb0] sm:$0xf]
    %v1428 = vld [vmem:[#allocation6 + $0xb4] sm:$0xf]
    %v1429 = vld [vmem:[#allocation6 + $0xb8] sm:$0xf]
    %v1430 = vld [vmem:[#allocation6 + $0xbc] sm:$0xf]
    %v1431 = vld [vmem:[#allocation6 + $0xc0] sm:$0xf]
    %v1432 = vld [vmem:[#allocation6 + $0xc4] sm:$0xf]
    %v1433 = vld [vmem:[#allocation6 + $0xc8] sm:$0xf]
    %v1434 = vld [vmem:[#allocation6 + $0xcc] sm:$0xf]
    %v1435 = vld [vmem:[#allocation6 + $0xd0] sm:$0xf]
    %v1436 = vld [vmem:[#allocation6 + $0xd4] sm:$0xf]
    %v1437 = vld [vmem:[#allocation6 + $0xd8] sm:$0xf]
    %v1438 = vld [vmem:[#allocation6 + $0xdc] sm:$0xf]
    %v1439 = vld [vmem:[#allocation6 + $0xe0] sm:$0xf]
    %v1440 = vld [vmem:[#allocation6 + $0xe4] sm:$0xf]
    %v1441 = vld [vmem:[#allocation6 + $0xe8] sm:$0xf]
    %v1442 = vld [vmem:[#allocation6 + $0xec] sm:$0xf]
    %v1443 = vld [vmem:[#allocation6 + $0xf0] sm:$0xf]
    %v1444 = vld [vmem:[#allocation6 + $0xf4] sm:$0xf]
    %v1445 = vld [vmem:[#allocation6 + $0xf8] sm:$0xf]
    %v1446 = vld [vmem:[#allocation6 + $0xfc] sm:$0xf]
    %v1447 = vperm.slane %v92, 0
    %v1512 = vunpack.c.l.b16 %v1383
    %v1513 = vunpack.c.l.b16 %v1384
    %v1514 = vunpack.c.l.b16 %v1385
    %v1515 = vunpack.c.l.b16 %v1386
    %v1516 = vunpack.c.l.b16 %v1387
    %v1517 = vunpack.c.l.b16 %v1388
    %v1518 = vunpack.c.l.b16 %v1389
    %v1519 = vunpack.c.l.b16 %v1390
    %v1520 = vunpack.c.l.b16 %v1391
    %v1521 = vunpack.c.l.b16 %v1392
    %v1522 = vunpack.c.l.b16 %v1393
    %v1523 = vunpack.c.l.b16 %v1394
    %v1524 = vunpack.c.l.b16 %v1395
    %v1525 = vunpack.c.l.b16 %v1396
    %v1526 = vunpack.c.l.b16 %v1397
    %v1527 = vunpack.c.l.b16 %v1398
    %v1528 = vunpack.c.l.b16 %v1399
    %v1529 = vunpack.c.l.b16 %v1400
    %v1530 = vunpack.c.l.b16 %v1401
    %v1531 = vunpack.c.l.b16 %v1402
    %v1532 = vunpack.c.l.b16 %v1403
    %v1533 = vunpack.c.l.b16 %v1404
    %v1534 = vunpack.c.l.b16 %v1405
    %v1535 = vunpack.c.l.b16 %v1406
    %v1536 = vunpack.c.l.b16 %v1407
    %v1537 = vunpack.c.l.b16 %v1408
    %v1538 = vunpack.c.l.b16 %v1409
    %v1539 = vunpack.c.l.b16 %v1410
    %v1540 = vunpack.c.l.b16 %v1411
    %v1541 = vunpack.c.l.b16 %v1412
    %v1542 = vunpack.c.l.b16 %v1413
    %v1543 = vunpack.c.l.b16 %v1414
    %v1544 = vunpack.c.l.b16 %v1415
    %v1545 = vunpack.c.l.b16 %v1416
    %v1546 = vunpack.c.l.b16 %v1417
    %v1547 = vunpack.c.l.b16 %v1418
    %v1548 = vunpack.c.l.b16 %v1419
    %v1549 = vunpack.c.l.b16 %v1420
    %v1550 = vunpack.c.l.b16 %v1421
    %v1551 = vunpack.c.l.b16 %v1422
    %v1552 = vunpack.c.l.b16 %v1423
    %v1553 = vunpack.c.l.b16 %v1424
    %v1554 = vunpack.c.l.b16 %v1425
    %v1555 = vunpack.c.l.b16 %v1426
    %v1556 = vunpack.c.l.b16 %v1427
    %v1557 = vunpack.c.l.b16 %v1428
    %v1558 = vunpack.c.l.b16 %v1429
    %v1559 = vunpack.c.l.b16 %v1430
    %v1560 = vunpack.c.l.b16 %v1431
    %v1561 = vunpack.c.l.b16 %v1432
    %v1562 = vunpack.c.l.b16 %v1433
    %v1563 = vunpack.c.l.b16 %v1434
    %v1564 = vunpack.c.l.b16 %v1435
    %v1565 = vunpack.c.l.b16 %v1436
    %v1566 = vunpack.c.l.b16 %v1437
    %v1567 = vunpack.c.l.b16 %v1438
    %v1568 = vunpack.c.l.b16 %v1439
    %v1569 = vunpack.c.l.b16 %v1440
    %v1570 = vunpack.c.l.b16 %v1441
    %v1571 = vunpack.c.l.b16 %v1442
    %v1572 = vunpack.c.l.b16 %v1443
    %v1573 = vunpack.c.l.b16 %v1444
    %v1574 = vunpack.c.l.b16 %v1445
    %v1575 = vunpack.c.l.b16 %v1446
    %v1576 = vpack.c.b16 %v1513, %v1512
    %v1577 = vpack.c.b16 %v1515, %v1514
    %v1578 = vpack.c.b16 %v1517, %v1516
    %v1579 = vpack.c.b16 %v1519, %v1518
    %v1580 = vpack.c.b16 %v1521, %v1520
    %v1581 = vpack.c.b16 %v1523, %v1522
    %v1582 = vpack.c.b16 %v1525, %v1524
    %v1583 = vpack.c.b16 %v1527, %v1526
    %v1584 = vpack.c.b16 %v1529, %v1528
    %v1585 = vpack.c.b16 %v1531, %v1530
    %v1586 = vpack.c.b16 %v1533, %v1532
    %v1587 = vpack.c.b16 %v1535, %v1534
    %v1588 = vpack.c.b16 %v1537, %v1536
    %v1589 = vpack.c.b16 %v1539, %v1538
    %v1590 = vpack.c.b16 %v1541, %v1540
    %v1591 = vpack.c.b16 %v1543, %v1542
    %v1592 = vpack.c.b16 %v1545, %v1544
    %v1593 = vpack.c.b16 %v1547, %v1546
    %v1594 = vpack.c.b16 %v1549, %v1548
    %v1595 = vpack.c.b16 %v1551, %v1550
    %v1596 = vpack.c.b16 %v1553, %v1552
    %v1597 = vpack.c.b16 %v1555, %v1554
    %v1598 = vpack.c.b16 %v1557, %v1556
    %v1599 = vpack.c.b16 %v1559, %v1558
    %v1600 = vpack.c.b16 %v1561, %v1560
    %v1601 = vpack.c.b16 %v1563, %v1562
    %v1602 = vpack.c.b16 %v1565, %v1564
    %v1603 = vpack.c.b16 %v1567, %v1566
    %v1604 = vpack.c.b16 %v1569, %v1568
    %v1605 = vpack.c.b16 %v1571, %v1570
    %v1606 = vpack.c.b16 %v1573, %v1572
    %v1607 = vpack.c.b16 %v1575, %v1574
    %1640 = vmatpush.bf16.msra.mxu0 %v1583
    %1641 = vmatpush.bf16.msra.mxu0 %v1582
    %1642 = vmatpush.bf16.msra.mxu0 %v1581
    %1643 = vmatpush.bf16.msra.mxu0 %v1580
    %1644 = vmatpush.bf16.msra.mxu0 %v1579
    %1645 = vmatpush.bf16.msra.mxu0 %v1578
    %1646 = vmatpush.bf16.msra.mxu0 %v1577
    %1647 = vmatpush.bf16.msra.mxu0 %v1576
    %1648 = vmatmul.bf16.gmra.mxu0 %v1379
    %v1649 = vpop.f32.mrf.mxu0
    %v1650 = vadd.f32 %v1447, %v1649
    %v1651 = vpop.f32.mrf.mxu0
    %1652 = vdwg.mxu0
    %1653 = vmatpush.bf16.msra.mxu0 %v1591
    %1654 = vmatpush.bf16.msra.mxu0 %v1590
    %1655 = vmatpush.bf16.msra.mxu0 %v1589
    %1656 = vmatpush.bf16.msra.mxu0 %v1588
    %1657 = vmatpush.bf16.msra.mxu0 %v1587
    %1658 = vmatpush.bf16.msra.mxu0 %v1586
    %1659 = vmatpush.bf16.msra.mxu0 %v1585
    %1660 = vmatpush.bf16.msra.mxu0 %v1584
    %1661 = vmatmul.bf16.gmra.mxu0 %v1380
    %v1662 = vpop.f32.mrf.mxu0
    %v1663 = vadd.f32 %v1650, %v1662
    %v1664 = vpop.f32.mrf.mxu0
    %1665 = vdwg.mxu0
    %1666 = vmatpush.bf16.msra.mxu0 %v1599
    %1667 = vmatpush.bf16.msra.mxu0 %v1598
    %1668 = vmatpush.bf16.msra.mxu0 %v1597
    %1669 = vmatpush.bf16.msra.mxu0 %v1596
    %1670 = vmatpush.bf16.msra.mxu0 %v1595
    %1671 = vmatpush.bf16.msra.mxu0 %v1594
    %1672 = vmatpush.bf16.msra.mxu0 %v1593
    %1673 = vmatpush.bf16.msra.mxu0 %v1592
    %1674 = vmatmul.bf16.gmra.mxu0 %v1381
    %v1675 = vpop.f32.mrf.mxu0
    %v1676 = vadd.f32 %v1663, %v1675
    %v1677 = vpop.f32.mrf.mxu0
    %1678 = vdwg.mxu0
    %1679 = vmatpush.bf16.msra.mxu0 %v1607
    %1680 = vmatpush.bf16.msra.mxu0 %v1606
    %1681 = vmatpush.bf16.msra.mxu0 %v1605
    %1682 = vmatpush.bf16.msra.mxu0 %v1604
    %1683 = vmatpush.bf16.msra.mxu0 %v1603
    %1684 = vmatpush.bf16.msra.mxu0 %v1602
    %1685 = vmatpush.bf16.msra.mxu0 %v1601
    %1686 = vmatpush.bf16.msra.mxu0 %v1600
    %1687 = vmatmul.bf16.gmra.mxu0 %v1382
    %v1688 = vpop.f32.mrf.mxu0
    %v1689 = vadd.f32 %v1676, %v1688
    %v1690 = vpop.f32.mrf.mxu0
    %1691 = vdwg.mxu0
    %1692 = vst [vmem:[%s6] sm:$0xff] %v1689
    // Predicated region
    $region42: #{linear_model_forward.1} parent=1 // pred_check
      _
    $region43: #{linear_model_forward.1} parent=1 // pred_check_branch
      %1694 = sbr.rel (0) target = $region45
    $region44: #{linear_model_forward.1} parent=1 // pred_region
      _
    $region45: #{linear_model_forward.1} parent=1 // pred_fallthru
      _
    // Predicated region
    $region46: #{linear_model_forward.1} parent=1 // pred_check
      _
    $region47: #{linear_model_forward.1} parent=1 // pred_check_branch
      %1696 = sbr.rel (0) target = $region49
    $region48: #{linear_model_forward.1} parent=1 // pred_region
      _
    $region49: #{linear_model_forward.1} parent=1 // pred_fallthru
      _
    %1697 = vsyncpa [#allocation3], 1
    %1698 = vsyncpa [#allocation5], 1
    %1699 = vsyncpa [#allocation8], 1

</llo_original>
